<compile_context>
chip_gen: v7x
topology: tpu7x:2x2x1
jax: 0.10.0
libtpu: 0.0.40
codegen_flags: <defaults>
</compile_context>

<pallas_src>
import numpy as np
import jax
import jax.numpy as jnp
from jax.experimental import pallas as pl
from jax.experimental.pallas import tpu as pltpu

# -------------------- small, module-consistent configuration --------------------
B            = 2      # batch
C_IN         = 3      # RGB input (asResnet uses AdaptiveConv(3, 3, ...))
INPUT_SIZE   = 16     # input spatial size (stands in for 512); == trilinear ori_size
ATT_HW       = 8      # spatial size of the att_model feature map x_att
ATT_C        = 4      # channels of x_att (sort network below assumes exactly 4)
NUM_FEATURES = 32     # base_model.num_features
NUM_CLASSES  = 10     # num_classes
DENSE_FACTOR = 5.0    # trilinear_att scale (default 5)
LANE         = 128    # TPU lane width; logits are padded to this in-kernel

assert ATT_C == 4, "in-kernel compare-exchange sort network is specialised to 4 channels"
assert INPUT_SIZE == 2 * ATT_HW, "att_model surrogate uses a 2x2 average pool"
assert NUM_CLASSES <= LANE


# ============================ fused forward kernel ==============================

def _as_resnet_kernel(x_ref, poolT_ref, wconv_ref, wfcT_ref, bfc_ref, upT_ref,
                      wfeat_ref, wclsT_ref, bcls_ref,
                      satt_ref, attlog_ref, logits_ref):
  """Whole asResnet eval forward for all B examples in one invocation (no grid)."""
  x6 = x_ref[...]                        # (B*C_IN, S*S) full-resolution input
  wconv = wconv_ref[...]                 # (ATT_C, C_IN)   att_model surrogate conv
  wfcT = wfcT_ref[...]                   # (ATT_C, LANE)   att head, pre-T + padded
  bfc = bfc_ref[...]                     # (1, LANE)
  upT = upT_ref[...]                     # (ATT_HW^2, S*S) kron(bilinear, bilinear).T
  wfeat = wfeat_ref[...]                 # (NUM_FEATURES, C_IN)
  wclsT = wclsT_ref[...]                 # (NUM_FEATURES, LANE) classifier, pre-T + padded
  bcls = bcls_ref[...]                   # (1, LANE)

  bsz = x6.shape[0] // C_IN
  # Fused 2x2 average pool + flatten for the attention branch (all B*C_IN maps at
  # once): one K=S*S matmul against the precomputed pooling matrix.
  x_ds = jnp.dot(x6, poolT_ref[...], preferred_element_type=jnp.float32)  # (B*C_IN, 64)

  satt_rows, attlog_rows, logit_rows = [], [], []
  for b in range(bsz):
    # ---- att_model surrogate: 1x1 conv (K=3 -> VPU FMA) + ReLU -> x_att ----
    feat = None
    for c in range(C_IN):
      term = wconv[:, c:c + 1] * x_ds[b * C_IN + c: b * C_IN + c + 1, :]
      feat = term if feat is None else feat + term
    feat = jnp.maximum(feat, 0.0)                                  # (ATT_C, 64)

    # att_logits head: GAP -> linear (K=4 -> VPU FMA, weights lane-padded on host)
    gap = jnp.mean(feat, axis=1, keepdims=True)                    # (ATT_C, 1)
    alog = bfc
    for a in range(ATT_C):
      alog = alog + gap[a:a + 1, 0:1] * wfcT[a:a + 1, :]
    attlog_rows.append(alog)                                       # (1, LANE)

    # ---- trilinear_att ----
    z = feat * DENSE_FACTOR
    z = z - jnp.max(z, axis=1, keepdims=True)
    e = jnp.exp(z)
    fnorm = e / jnp.sum(e, axis=1, keepdims=True)                  # Softmax(dim=2)
    bil = jnp.dot(fnorm, feat.T, preferred_element_type=jnp.float32)  # (ATT_C, ATT_C)
    bil = bil - jnp.max(bil, axis=1, keepdims=True)
    be = jnp.exp(bil)
    bnorm = be / jnp.sum(be, axis=1, keepdims=True)                # Softmax(dim=2)
    # trilinear = bnorm @ feat: K=4 contraction done as 4 VPU broadcast FMAs
    tri = None
    for c in range(ATT_C):
      term = bnorm[:, c:c + 1] * feat[c:c + 1, :]
      tri = term if tri is None else tri + term                    # (ATT_C, 64)

    # per-channel spatial sums -> 4-element compare-exchange sort -> dedup mask.
    # The mask is computed in sorted order but applied to the ORIGINAL channel
    # order, exactly as written in the PyTorch module.
    ssum = jnp.sum(tri, axis=1, keepdims=True)                     # (ATT_C, 1)
    s0, s1, s2, s3 = (ssum[0:1, :], ssum[1:2, :], ssum[2:3, :], ssum[3:4, :])
    lo01, hi01 = jnp.minimum(s0, s1), jnp.maximum(s0, s1)
    lo23, hi23 = jnp.minimum(s2, s3), jnp.maximum(s2, s3)
    v0, t2 = jnp.minimum(lo01, lo23), jnp.maximum(lo01, lo23)
    t1, v3 = jnp.minimum(hi01, hi23), jnp.maximum(hi01, hi23)
    v1, v2 = jnp.minimum(t1, t2), jnp.maximum(t1, t2)
    m1 = (v1 != v0).astype(jnp.float32)
    m2 = (v2 != v1).astype(jnp.float32)
    m3 = (v3 != v2).astype(jnp.float32)
    small = (tri[0:1, :] + m1 * tri[1:2, :]
             + m2 * tri[2:3, :] + m3 * tri[3:4, :])                # (1, 64)

    # bilinear upsample (align_corners=False) + flatten as one kron matmul, square.
    up = jnp.dot(small, upT, preferred_element_type=jnp.float32)   # (1, S*S)
    satt_rows.append(up * up)

    # ---- base_model.features surrogate (1x1 conv + ReLU) + GAP + classifier ----
    bfeat = None
    for c in range(C_IN):
      term = wfeat[:, c:c + 1] * x6[b * C_IN + c: b * C_IN + c + 1, :]
      bfeat = term if bfeat is None else bfeat + term
    bfeat = jnp.maximum(bfeat, 0.0)                                # (NUM_FEATURES, S*S)
    pooled = jnp.mean(bfeat, axis=1, keepdims=True)                # (NUM_FEATURES, 1)
    lg = jnp.dot(pooled.T, wclsT, preferred_element_type=jnp.float32)  # (1, LANE)
    logit_rows.append(lg + bcls)

  # single lane-dense stores
  satt_ref[...] = jnp.concatenate(satt_rows, axis=0)               # (B, S*S)
  attlog_ref[...] = jnp.concatenate(attlog_rows, axis=0)           # (B, LANE)
  logits_ref[...] = jnp.concatenate(logit_rows, axis=0)            # (B, LANE)


# ============================ host-side prep ====================================

def _bilinear_matrix(out_size, in_size):
  # PyTorch bilinear, align_corners=False (half-pixel centers, negatives clamped).
  scale = in_size / out_size
  idx = np.arange(out_size, dtype=np.float64)
  src = np.maximum((idx + 0.5) * scale - 0.5, 0.0)
  i0 = np.minimum(np.floor(src).astype(np.int64), in_size - 1)
  i1 = np.minimum(i0 + 1, in_size - 1)
  lam = src - i0
  w = np.zeros((out_size, in_size), dtype=np.float64)
  w[np.arange(out_size), i0] += 1.0 - lam
  w[np.arange(out_size), i1] += lam
  return w.astype(np.float32)


def _avgpool2_matrix(out_size):
  # (out, 2*out) row-averaging matrix for a 2x2 average pool along one axis.
  p = np.zeros((out_size, 2 * out_size), dtype=np.float32)
  r = np.arange(out_size)
  p[r, 2 * r] = 0.5
  p[r, 2 * r + 1] = 0.5
  return p


def init_params(key):
  k = jax.random.split(key, 4)

  def scaled(kk, shape):
    return (jax.random.normal(kk, shape, dtype=jnp.float32)
            / jnp.sqrt(jnp.float32(shape[-1])))

  return dict(
      att_conv_w=scaled(k[0], (ATT_C, C_IN)),           # att_model surrogate conv
      att_fc_w=scaled(k[1], (NUM_CLASSES, ATT_C)),      # att_model surrogate head
      att_fc_b=jnp.zeros((1, NUM_CLASSES), jnp.float32),
      feat_w=scaled(k[2], (NUM_FEATURES, C_IN)),        # base_model.features surrogate
      cls_w=scaled(k[3], (NUM_CLASSES, NUM_FEATURES)),  # base_classifier
      cls_b=jnp.zeros((1, NUM_CLASSES), jnp.float32),
  )


def prepare_params(params):
  """Pre-transpose / lane-pad weights and build the pooling + upsample matrices."""
  def pad_cols(w, width):
    out = jnp.zeros((w.shape[0], width), w.dtype)
    return out.at[:, :w.shape[1]].set(w)

  pool = np.kron(_avgpool2_matrix(ATT_HW), _avgpool2_matrix(ATT_HW))   # (64, 256)
  wb = _bilinear_matrix(INPUT_SIZE, ATT_HW)                            # (16, 8)
  up = np.kron(wb, wb)                                                 # (256, 64)
  return dict(
      wconv=params["att_conv_w"],                       # (ATT_C, C_IN)
      wfcT=pad_cols(params["att_fc_w"].T, LANE),        # (ATT_C, LANE)
      bfc=pad_cols(params["att_fc_b"], LANE),           # (1, LANE)
      wfeat=params["feat_w"],                           # (NUM_FEATURES, C_IN)
      wclsT=pad_cols(params["cls_w"].T, LANE),          # (NUM_FEATURES, LANE)
      bcls=pad_cols(params["cls_b"], LANE),             # (1, LANE)
      poolT=jnp.asarray(pool.T),                        # (S*S, ATT_HW^2)
      upT=jnp.asarray(up.T),                            # (ATT_HW^2, S*S)
  )


# ================================ forward =======================================

def as_resnet_forward(prep, x):
  b, cin, s, _ = x.shape
  hw = s * s
  x6 = x.reshape(b * cin, hw)

  vmem = pl.BlockSpec(memory_space=pltpu.MemorySpace.VMEM)
  satt_flat, attlog_pad, logits_pad = pl.pallas_call(
      _as_resnet_kernel,
      out_shape=(jax.ShapeDtypeStruct((b, hw), jnp.float32),    # structure_att, flat
                 jax.ShapeDtypeStruct((b, LANE), jnp.float32),  # att_logits, padded
                 jax.ShapeDtypeStruct((b, LANE), jnp.float32)), # logits, padded
      in_specs=[vmem] * 9,
      out_specs=(vmem, vmem, vmem),
  )(x6, prep["poolT"], prep["wconv"], prep["wfcT"], prep["bfc"], prep["upT"],
    prep["wfeat"], prep["wclsT"], prep["bcls"])

  logits = logits_pad[:, :NUM_CLASSES]
  att_logits = attlog_pad[:, :NUM_CLASSES]
  structure_att = satt_flat.reshape(b, s, s)

  # TODO(synk): att_grid_generator_cuda.forward and AdaptiveConv/AdaptiveSam (as_conv)
  # are custom CUDA extensions with no reference implementation, so the adaptive
  # re-sampling step is skipped (x_rei = x). structure_att / att_logits are returned
  # alongside logits so the attention branch stays live under jit (the original eval
  # path returns only logits).
  return logits, structure_att, att_logits


if __name__ == "__main__":
  key = jax.random.PRNGKey(0)
  kp, kx = jax.random.split(key)
  params = init_params(kp)
  prep = prepare_params(params)
  x = jax.random.normal(kx, (B, C_IN, INPUT_SIZE, INPUT_SIZE), dtype=jnp.float32)

  fwd = jax.jit(as_resnet_forward)
  logits, structure_att, att_logits = fwd(prep, x)
  jax.block_until_ready((logits, structure_att, att_logits))

  assert logits.shape == (B, NUM_CLASSES)
  assert structure_att.shape == (B, INPUT_SIZE, INPUT_SIZE)
  assert att_logits.shape == (B, NUM_CLASSES)
  assert bool(jnp.all(jnp.isfinite(logits)))
  assert bool(jnp.all(jnp.isfinite(structure_att)))
  assert bool(jnp.all(jnp.isfinite(att_logits)))
  print("KERNEL_OK")
</pallas_src>

<mosaic_0001>
module attributes {stable_mosaic.version = 11 : i64} {
  func.func @_as_resnet_kernel(%arg0: memref<6x256xf32, #tpu.memory_space<vmem>>, %arg1: memref<256x64xf32, #tpu.memory_space<vmem>>, %arg2: memref<4x3xf32, #tpu.memory_space<vmem>>, %arg3: memref<4x128xf32, #tpu.memory_space<vmem>>, %arg4: memref<1x128xf32, #tpu.memory_space<vmem>>, %arg5: memref<64x256xf32, #tpu.memory_space<vmem>>, %arg6: memref<32x3xf32, #tpu.memory_space<vmem>>, %arg7: memref<32x128xf32, #tpu.memory_space<vmem>>, %arg8: memref<1x128xf32, #tpu.memory_space<vmem>>, %arg9: memref<2x256xf32, #tpu.memory_space<vmem>>, %arg10: memref<2x128xf32, #tpu.memory_space<vmem>>, %arg11: memref<2x128xf32, #tpu.memory_space<vmem>>) attributes {dimension_semantics = [], scalar_prefetch = 0 : i64, scratch_operands = 0 : i64, tpu.core_type = #tpu.core_type<tc>} {
    %c0 = arith.constant 0 : index
    %c0_0 = arith.constant 0 : index
    %0 = vector.load %arg0[%c0, %c0_0] : memref<6x256xf32, #tpu.memory_space<vmem>>, vector<6x256xf32>
    %c0_1 = arith.constant 0 : index
    %c0_2 = arith.constant 0 : index
    %1 = vector.load %arg2[%c0_1, %c0_2] : memref<4x3xf32, #tpu.memory_space<vmem>>, vector<4x3xf32>
    %c0_3 = arith.constant 0 : index
    %c0_4 = arith.constant 0 : index
    %2 = vector.load %arg3[%c0_3, %c0_4] : memref<4x128xf32, #tpu.memory_space<vmem>>, vector<4x128xf32>
    %c0_5 = arith.constant 0 : index
    %c0_6 = arith.constant 0 : index
    %3 = vector.load %arg4[%c0_5, %c0_6] : memref<1x128xf32, #tpu.memory_space<vmem>>, vector<1x128xf32>
    %c0_7 = arith.constant 0 : index
    %c0_8 = arith.constant 0 : index
    %4 = vector.load %arg5[%c0_7, %c0_8] : memref<64x256xf32, #tpu.memory_space<vmem>>, vector<64x256xf32>
    %c0_9 = arith.constant 0 : index
    %c0_10 = arith.constant 0 : index
    %5 = vector.load %arg6[%c0_9, %c0_10] : memref<32x3xf32, #tpu.memory_space<vmem>>, vector<32x3xf32>
    %c0_11 = arith.constant 0 : index
    %c0_12 = arith.constant 0 : index
    %6 = vector.load %arg7[%c0_11, %c0_12] : memref<32x128xf32, #tpu.memory_space<vmem>>, vector<32x128xf32>
    %c0_13 = arith.constant 0 : index
    %c0_14 = arith.constant 0 : index
    %7 = vector.load %arg8[%c0_13, %c0_14] : memref<1x128xf32, #tpu.memory_space<vmem>>, vector<1x128xf32>
    %c0_15 = arith.constant 0 : index
    %c0_16 = arith.constant 0 : index
    %8 = vector.load %arg1[%c0_15, %c0_16] : memref<256x64xf32, #tpu.memory_space<vmem>>, vector<256x64xf32>
    %cst = arith.constant dense<0.000000e+00> : vector<6x64xf32>
    %9 = tpu.matmul %0, %8, %cst {dimension_numbers = #tpu.dot_dimension_numbers<[1], [0], [0], [1], [0, 0, 1, 1], [], []>} : vector<6x256xf32>, vector<256x64xf32>, vector<6x64xf32> -> vector<6x64xf32>
    %10 = vector.extract_strided_slice %1 {offsets = [0, 0], sizes = [4, 1], strides = [1, 1]} : vector<4x3xf32> to vector<4x1xf32>
    %11 = vector.extract_strided_slice %9 {offsets = [0, 0], sizes = [1, 64], strides = [1, 1]} : vector<6x64xf32> to vector<1x64xf32>
    %12 = vector.broadcast %10 : vector<4x1xf32> to vector<4x64xf32>
    %13 = vector.broadcast %11 : vector<1x64xf32> to vector<4x64xf32>
    %14 = arith.mulf %12, %13 : vector<4x64xf32>
    %15 = vector.extract_strided_slice %1 {offsets = [0, 1], sizes = [4, 1], strides = [1, 1]} : vector<4x3xf32> to vector<4x1xf32>
    %16 = vector.extract_strided_slice %9 {offsets = [1, 0], sizes = [1, 64], strides = [1, 1]} : vector<6x64xf32> to vector<1x64xf32>
    %17 = vector.broadcast %15 : vector<4x1xf32> to vector<4x64xf32>
    %18 = vector.broadcast %16 : vector<1x64xf32> to vector<4x64xf32>
    %19 = arith.mulf %17, %18 : vector<4x64xf32>
    %20 = arith.addf %14, %19 : vector<4x64xf32>
    %21 = vector.extract_strided_slice %1 {offsets = [0, 2], sizes = [4, 1], strides = [1, 1]} : vector<4x3xf32> to vector<4x1xf32>
    %22 = vector.extract_strided_slice %9 {offsets = [2, 0], sizes = [1, 64], strides = [1, 1]} : vector<6x64xf32> to vector<1x64xf32>
    %23 = vector.broadcast %21 : vector<4x1xf32> to vector<4x64xf32>
    %24 = vector.broadcast %22 : vector<1x64xf32> to vector<4x64xf32>
    %25 = arith.mulf %23, %24 : vector<4x64xf32>
    %26 = arith.addf %20, %25 : vector<4x64xf32>
    %cst_17 = arith.constant 0.000000e+00 : f32
    %27 = vector.broadcast %cst_17 : f32 to vector<4x64xf32>
    %28 = arith.maximumf %26, %27 : vector<4x64xf32>
    %cst_18 = arith.constant dense<0.000000e+00> : vector<4xf32>
    %29 = vector.multi_reduction <add>, %28, %cst_18 [1] : vector<4x64xf32> to vector<4xf32>
    %30 = vector.shape_cast %29 : vector<4xf32> to vector<4x1xf32>
    %cst_19 = arith.constant 6.400000e+01 : f32
    %31 = vector.broadcast %cst_19 : f32 to vector<4x1xf32>
    %32 = arith.divf %30, %31 : vector<4x1xf32>
    %33 = vector.extract_strided_slice %32 {offsets = [0, 0], sizes = [1, 1], strides = [1, 1]} : vector<4x1xf32> to vector<1x1xf32>
    %34 = vector.extract_strided_slice %2 {offsets = [0, 0], sizes = [1, 128], strides = [1, 1]} : vector<4x128xf32> to vector<1x128xf32>
    %35 = vector.broadcast %33 : vector<1x1xf32> to vector<1x128xf32>
    %36 = arith.mulf %35, %34 : vector<1x128xf32>
    %37 = arith.addf %3, %36 : vector<1x128xf32>
    %38 = vector.extract_strided_slice %32 {offsets = [1, 0], sizes = [1, 1], strides = [1, 1]} : vector<4x1xf32> to vector<1x1xf32>
    %39 = vector.extract_strided_slice %2 {offsets = [1, 0], sizes = [1, 128], strides = [1, 1]} : vector<4x128xf32> to vector<1x128xf32>
    %40 = vector.broadcast %38 : vector<1x1xf32> to vector<1x128xf32>
    %41 = arith.mulf %40, %39 : vector<1x128xf32>
    %42 = arith.addf %37, %41 : vector<1x128xf32>
    %43 = vector.extract_strided_slice %32 {offsets = [2, 0], sizes = [1, 1], strides = [1, 1]} : vector<4x1xf32> to vector<1x1xf32>
    %44 = vector.extract_strided_slice %2 {offsets = [2, 0], sizes = [1, 128], strides = [1, 1]} : vector<4x128xf32> to vector<1x128xf32>
    %45 = vector.broadcast %43 : vector<1x1xf32> to vector<1x128xf32>
    %46 = arith.mulf %45, %44 : vector<1x128xf32>
    %47 = arith.addf %42, %46 : vector<1x128xf32>
    %48 = vector.extract_strided_slice %32 {offsets = [3, 0], sizes = [1, 1], strides = [1, 1]} : vector<4x1xf32> to vector<1x1xf32>
    %49 = vector.extract_strided_slice %2 {offsets = [3, 0], sizes = [1, 128], strides = [1, 1]} : vector<4x128xf32> to vector<1x128xf32>
    %50 = vector.broadcast %48 : vector<1x1xf32> to vector<1x128xf32>
    %51 = arith.mulf %50, %49 : vector<1x128xf32>
    %52 = arith.addf %47, %51 : vector<1x128xf32>
    %cst_20 = arith.constant 5.000000e+00 : f32
    %53 = vector.broadcast %cst_20 : f32 to vector<4x64xf32>
    %54 = arith.mulf %28, %53 : vector<4x64xf32>
    %cst_21 = arith.constant dense<0xFF800000> : vector<4xf32>
    %55 = vector.multi_reduction <maximumf>, %54, %cst_21 [1] : vector<4x64xf32> to vector<4xf32>
    %56 = vector.shape_cast %55 : vector<4xf32> to vector<4x1xf32>
    %57 = vector.broadcast %56 : vector<4x1xf32> to vector<4x64xf32>
    %58 = arith.subf %54, %57 : vector<4x64xf32>
    %59 = math.exp %58 : vector<4x64xf32>
    %cst_22 = arith.constant dense<0.000000e+00> : vector<4xf32>
    %60 = vector.multi_reduction <add>, %59, %cst_22 [1] : vector<4x64xf32> to vector<4xf32>
    %61 = vector.shape_cast %60 : vector<4xf32> to vector<4x1xf32>
    %62 = vector.broadcast %61 : vector<4x1xf32> to vector<4x64xf32>
    %63 = arith.divf %59, %62 : vector<4x64xf32>
    %64 = tpu.transpose %28, [1, 0] : vector<4x64xf32> -> vector<64x4xf32>
    %cst_23 = arith.constant dense<0.000000e+00> : vector<4x4xf32>
    %65 = tpu.matmul %63, %64, %cst_23 {dimension_numbers = #tpu.dot_dimension_numbers<[1], [0], [0], [1], [0, 0, 1, 1], [], []>} : vector<4x64xf32>, vector<64x4xf32>, vector<4x4xf32> -> vector<4x4xf32>
    %cst_24 = arith.constant dense<0xFF800000> : vector<4xf32>
    %66 = vector.multi_reduction <maximumf>, %65, %cst_24 [1] : vector<4x4xf32> to vector<4xf32>
    %67 = vector.shape_cast %66 : vector<4xf32> to vector<4x1xf32>
    %68 = vector.broadcast %67 : vector<4x1xf32> to vector<4x4xf32>
    %69 = arith.subf %65, %68 : vector<4x4xf32>
    %70 = math.exp %69 : vector<4x4xf32>
    %cst_25 = arith.constant dense<0.000000e+00> : vector<4xf32>
    %71 = vector.multi_reduction <add>, %70, %cst_25 [1] : vector<4x4xf32> to vector<4xf32>
    %72 = vector.shape_cast %71 : vector<4xf32> to vector<4x1xf32>
    %73 = vector.broadcast %72 : vector<4x1xf32> to vector<4x4xf32>
    %74 = arith.divf %70, %73 : vector<4x4xf32>
    %75 = vector.extract_strided_slice %74 {offsets = [0, 0], sizes = [4, 1], strides = [1, 1]} : vector<4x4xf32> to vector<4x1xf32>
    %76 = vector.extract_strided_slice %28 {offsets = [0, 0], sizes = [1, 64], strides = [1, 1]} : vector<4x64xf32> to vector<1x64xf32>
    %77 = vector.broadcast %75 : vector<4x1xf32> to vector<4x64xf32>
    %78 = vector.broadcast %76 : vector<1x64xf32> to vector<4x64xf32>
    %79 = arith.mulf %77, %78 : vector<4x64xf32>
    %80 = vector.extract_strided_slice %74 {offsets = [0, 1], sizes = [4, 1], strides = [1, 1]} : vector<4x4xf32> to vector<4x1xf32>
    %81 = vector.extract_strided_slice %28 {offsets = [1, 0], sizes = [1, 64], strides = [1, 1]} : vector<4x64xf32> to vector<1x64xf32>
    %82 = vector.broadcast %80 : vector<4x1xf32> to vector<4x64xf32>
    %83 = vector.broadcast %81 : vector<1x64xf32> to vector<4x64xf32>
    %84 = arith.mulf %82, %83 : vector<4x64xf32>
    %85 = arith.addf %79, %84 : vector<4x64xf32>
    %86 = vector.extract_strided_slice %74 {offsets = [0, 2], sizes = [4, 1], strides = [1, 1]} : vector<4x4xf32> to vector<4x1xf32>
    %87 = vector.extract_strided_slice %28 {offsets = [2, 0], sizes = [1, 64], strides = [1, 1]} : vector<4x64xf32> to vector<1x64xf32>
    %88 = vector.broadcast %86 : vector<4x1xf32> to vector<4x64xf32>
    %89 = vector.broadcast %87 : vector<1x64xf32> to vector<4x64xf32>
    %90 = arith.mulf %88, %89 : vector<4x64xf32>
    %91 = arith.addf %85, %90 : vector<4x64xf32>
    %92 = vector.extract_strided_slice %74 {offsets = [0, 3], sizes = [4, 1], strides = [1, 1]} : vector<4x4xf32> to vector<4x1xf32>
    %93 = vector.extract_strided_slice %28 {offsets = [3, 0], sizes = [1, 64], strides = [1, 1]} : vector<4x64xf32> to vector<1x64xf32>
    %94 = vector.broadcast %92 : vector<4x1xf32> to vector<4x64xf32>
    %95 = vector.broadcast %93 : vector<1x64xf32> to vector<4x64xf32>
    %96 = arith.mulf %94, %95 : vector<4x64xf32>
    %97 = arith.addf %91, %96 : vector<4x64xf32>
    %cst_26 = arith.constant dense<0.000000e+00> : vector<4xf32>
    %98 = vector.multi_reduction <add>, %97, %cst_26 [1] : vector<4x64xf32> to vector<4xf32>
    %99 = vector.shape_cast %98 : vector<4xf32> to vector<4x1xf32>
    %100 = vector.extract_strided_slice %99 {offsets = [0, 0], sizes = [1, 1], strides = [1, 1]} : vector<4x1xf32> to vector<1x1xf32>
    %101 = vector.extract_strided_slice %99 {offsets = [1, 0], sizes = [1, 1], strides = [1, 1]} : vector<4x1xf32> to vector<1x1xf32>
    %102 = vector.extract_strided_slice %99 {offsets = [2, 0], sizes = [1, 1], strides = [1, 1]} : vector<4x1xf32> to vector<1x1xf32>
    %103 = vector.extract_strided_slice %99 {offsets = [3, 0], sizes = [1, 1], strides = [1, 1]} : vector<4x1xf32> to vector<1x1xf32>
    %104 = arith.minimumf %100, %101 : vector<1x1xf32>
    %105 = arith.maximumf %100, %101 : vector<1x1xf32>
    %106 = arith.minimumf %102, %103 : vector<1x1xf32>
    %107 = arith.maximumf %102, %103 : vector<1x1xf32>
    %108 = arith.minimumf %104, %106 : vector<1x1xf32>
    %109 = arith.maximumf %104, %106 : vector<1x1xf32>
    %110 = arith.minimumf %105, %107 : vector<1x1xf32>
    %111 = arith.maximumf %105, %107 : vector<1x1xf32>
    %112 = arith.minimumf %110, %109 : vector<1x1xf32>
    %113 = arith.maximumf %110, %109 : vector<1x1xf32>
    %114 = arith.cmpf one, %112, %108 : vector<1x1xf32>
    %115 = arith.extui %114 : vector<1x1xi1> to vector<1x1xi32>
    %116 = arith.sitofp %115 : vector<1x1xi32> to vector<1x1xf32>
    %117 = arith.cmpf one, %113, %112 : vector<1x1xf32>
    %118 = arith.extui %117 : vector<1x1xi1> to vector<1x1xi32>
    %119 = arith.sitofp %118 : vector<1x1xi32> to vector<1x1xf32>
    %120 = arith.cmpf one, %111, %113 : vector<1x1xf32>
    %121 = arith.extui %120 : vector<1x1xi1> to vector<1x1xi32>
    %122 = arith.sitofp %121 : vector<1x1xi32> to vector<1x1xf32>
    %123 = vector.extract_strided_slice %97 {offsets = [0, 0], sizes = [1, 64], strides = [1, 1]} : vector<4x64xf32> to vector<1x64xf32>
    %124 = vector.extract_strided_slice %97 {offsets = [1, 0], sizes = [1, 64], strides = [1, 1]} : vector<4x64xf32> to vector<1x64xf32>
    %125 = vector.broadcast %116 : vector<1x1xf32> to vector<1x64xf32>
    %126 = arith.mulf %125, %124 : vector<1x64xf32>
    %127 = arith.addf %123, %126 : vector<1x64xf32>
    %128 = vector.extract_strided_slice %97 {offsets = [2, 0], sizes = [1, 64], strides = [1, 1]} : vector<4x64xf32> to vector<1x64xf32>
    %129 = vector.broadcast %119 : vector<1x1xf32> to vector<1x64xf32>
    %130 = arith.mulf %129, %128 : vector<1x64xf32>
    %131 = arith.addf %127, %130 : vector<1x64xf32>
    %132 = vector.extract_strided_slice %97 {offsets = [3, 0], sizes = [1, 64], strides = [1, 1]} : vector<4x64xf32> to vector<1x64xf32>
    %133 = vector.broadcast %122 : vector<1x1xf32> to vector<1x64xf32>
    %134 = arith.mulf %133, %132 : vector<1x64xf32>
    %135 = arith.addf %131, %134 : vector<1x64xf32>
    %cst_27 = arith.constant dense<0.000000e+00> : vector<1x256xf32>
    %136 = tpu.matmul %135, %4, %cst_27 {dimension_numbers = #tpu.dot_dimension_numbers<[1], [0], [0], [1], [0, 0, 1, 1], [], []>} : vector<1x64xf32>, vector<64x256xf32>, vector<1x256xf32> -> vector<1x256xf32>
    %137 = arith.mulf %136, %136 : vector<1x256xf32>
    %138 = vector.extract_strided_slice %5 {offsets = [0, 0], sizes = [32, 1], strides = [1, 1]} : vector<32x3xf32> to vector<32x1xf32>
    %139 = vector.extract_strided_slice %0 {offsets = [0, 0], sizes = [1, 256], strides = [1, 1]} : vector<6x256xf32> to vector<1x256xf32>
    %140 = vector.broadcast %138 : vector<32x1xf32> to vector<32x256xf32>
    %141 = vector.broadcast %139 : vector<1x256xf32> to vector<32x256xf32>
    %142 = arith.mulf %140, %141 : vector<32x256xf32>
    %143 = vector.extract_strided_slice %5 {offsets = [0, 1], sizes = [32, 1], strides = [1, 1]} : vector<32x3xf32> to vector<32x1xf32>
    %144 = vector.extract_strided_slice %0 {offsets = [1, 0], sizes = [1, 256], strides = [1, 1]} : vector<6x256xf32> to vector<1x256xf32>
    %145 = vector.broadcast %143 : vector<32x1xf32> to vector<32x256xf32>
    %146 = vector.broadcast %144 : vector<1x256xf32> to vector<32x256xf32>
    %147 = arith.mulf %145, %146 : vector<32x256xf32>
    %148 = arith.addf %142, %147 : vector<32x256xf32>
    %149 = vector.extract_strided_slice %5 {offsets = [0, 2], sizes = [32, 1], strides = [1, 1]} : vector<32x3xf32> to vector<32x1xf32>
    %150 = vector.extract_strided_slice %0 {offsets = [2, 0], sizes = [1, 256], strides = [1, 1]} : vector<6x256xf32> to vector<1x256xf32>
    %151 = vector.broadcast %149 : vector<32x1xf32> to vector<32x256xf32>
    %152 = vector.broadcast %150 : vector<1x256xf32> to vector<32x256xf32>
    %153 = arith.mulf %151, %152 : vector<32x256xf32>
    %154 = arith.addf %148, %153 : vector<32x256xf32>
    %cst_28 = arith.constant 0.000000e+00 : f32
    %155 = vector.broadcast %cst_28 : f32 to vector<32x256xf32>
    %156 = arith.maximumf %154, %155 : vector<32x256xf32>
    %cst_29 = arith.constant dense<0.000000e+00> : vector<32xf32>
    %157 = vector.multi_reduction <add>, %156, %cst_29 [1] : vector<32x256xf32> to vector<32xf32>
    %158 = vector.shape_cast %157 : vector<32xf32> to vector<32x1xf32>
    %cst_30 = arith.constant 2.560000e+02 : f32
    %159 = vector.broadcast %cst_30 : f32 to vector<32x1xf32>
    %160 = arith.divf %158, %159 : vector<32x1xf32>
    %161 = tpu.transpose %160, [1, 0] : vector<32x1xf32> -> vector<1x32xf32>
    %cst_31 = arith.constant dense<0.000000e+00> : vector<1x128xf32>
    %162 = tpu.matmul %161, %6, %cst_31 {dimension_numbers = #tpu.dot_dimension_numbers<[1], [0], [0], [1], [0, 0, 1, 1], [], []>} : vector<1x32xf32>, vector<32x128xf32>, vector<1x128xf32> -> vector<1x128xf32>
    %163 = arith.addf %162, %7 : vector<1x128xf32>
    %164 = vector.extract_strided_slice %1 {offsets = [0, 0], sizes = [4, 1], strides = [1, 1]} : vector<4x3xf32> to vector<4x1xf32>
    %165 = vector.extract_strided_slice %9 {offsets = [3, 0], sizes = [1, 64], strides = [1, 1]} : vector<6x64xf32> to vector<1x64xf32>
    %166 = vector.broadcast %164 : vector<4x1xf32> to vector<4x64xf32>
    %167 = vector.broadcast %165 : vector<1x64xf32> to vector<4x64xf32>
    %168 = arith.mulf %166, %167 : vector<4x64xf32>
    %169 = vector.extract_strided_slice %1 {offsets = [0, 1], sizes = [4, 1], strides = [1, 1]} : vector<4x3xf32> to vector<4x1xf32>
    %170 = vector.extract_strided_slice %9 {offsets = [4, 0], sizes = [1, 64], strides = [1, 1]} : vector<6x64xf32> to vector<1x64xf32>
    %171 = vector.broadcast %169 : vector<4x1xf32> to vector<4x64xf32>
    %172 = vector.broadcast %170 : vector<1x64xf32> to vector<4x64xf32>
    %173 = arith.mulf %171, %172 : vector<4x64xf32>
    %174 = arith.addf %168, %173 : vector<4x64xf32>
    %175 = vector.extract_strided_slice %1 {offsets = [0, 2], sizes = [4, 1], strides = [1, 1]} : vector<4x3xf32> to vector<4x1xf32>
    %176 = vector.extract_strided_slice %9 {offsets = [5, 0], sizes = [1, 64], strides = [1, 1]} : vector<6x64xf32> to vector<1x64xf32>
    %177 = vector.broadcast %175 : vector<4x1xf32> to vector<4x64xf32>
    %178 = vector.broadcast %176 : vector<1x64xf32> to vector<4x64xf32>
    %179 = arith.mulf %177, %178 : vector<4x64xf32>
    %180 = arith.addf %174, %179 : vector<4x64xf32>
    %cst_32 = arith.constant 0.000000e+00 : f32
    %181 = vector.broadcast %cst_32 : f32 to vector<4x64xf32>
    %182 = arith.maximumf %180, %181 : vector<4x64xf32>
    %cst_33 = arith.constant dense<0.000000e+00> : vector<4xf32>
    %183 = vector.multi_reduction <add>, %182, %cst_33 [1] : vector<4x64xf32> to vector<4xf32>
    %184 = vector.shape_cast %183 : vector<4xf32> to vector<4x1xf32>
    %cst_34 = arith.constant 6.400000e+01 : f32
    %185 = vector.broadcast %cst_34 : f32 to vector<4x1xf32>
    %186 = arith.divf %184, %185 : vector<4x1xf32>
    %187 = vector.extract_strided_slice %186 {offsets = [0, 0], sizes = [1, 1], strides = [1, 1]} : vector<4x1xf32> to vector<1x1xf32>
    %188 = vector.extract_strided_slice %2 {offsets = [0, 0], sizes = [1, 128], strides = [1, 1]} : vector<4x128xf32> to vector<1x128xf32>
    %189 = vector.broadcast %187 : vector<1x1xf32> to vector<1x128xf32>
    %190 = arith.mulf %189, %188 : vector<1x128xf32>
    %191 = arith.addf %3, %190 : vector<1x128xf32>
    %192 = vector.extract_strided_slice %186 {offsets = [1, 0], sizes = [1, 1], strides = [1, 1]} : vector<4x1xf32> to vector<1x1xf32>
    %193 = vector.extract_strided_slice %2 {offsets = [1, 0], sizes = [1, 128], strides = [1, 1]} : vector<4x128xf32> to vector<1x128xf32>
    %194 = vector.broadcast %192 : vector<1x1xf32> to vector<1x128xf32>
    %195 = arith.mulf %194, %193 : vector<1x128xf32>
    %196 = arith.addf %191, %195 : vector<1x128xf32>
    %197 = vector.extract_strided_slice %186 {offsets = [2, 0], sizes = [1, 1], strides = [1, 1]} : vector<4x1xf32> to vector<1x1xf32>
    %198 = vector.extract_strided_slice %2 {offsets = [2, 0], sizes = [1, 128], strides = [1, 1]} : vector<4x128xf32> to vector<1x128xf32>
    %199 = vector.broadcast %197 : vector<1x1xf32> to vector<1x128xf32>
    %200 = arith.mulf %199, %198 : vector<1x128xf32>
    %201 = arith.addf %196, %200 : vector<1x128xf32>
    %202 = vector.extract_strided_slice %186 {offsets = [3, 0], sizes = [1, 1], strides = [1, 1]} : vector<4x1xf32> to vector<1x1xf32>
    %203 = vector.extract_strided_slice %2 {offsets = [3, 0], sizes = [1, 128], strides = [1, 1]} : vector<4x128xf32> to vector<1x128xf32>
    %204 = vector.broadcast %202 : vector<1x1xf32> to vector<1x128xf32>
    %205 = arith.mulf %204, %203 : vector<1x128xf32>
    %206 = arith.addf %201, %205 : vector<1x128xf32>
    %cst_35 = arith.constant 5.000000e+00 : f32
    %207 = vector.broadcast %cst_35 : f32 to vector<4x64xf32>
    %208 = arith.mulf %182, %207 : vector<4x64xf32>
    %cst_36 = arith.constant dense<0xFF800000> : vector<4xf32>
    %209 = vector.multi_reduction <maximumf>, %208, %cst_36 [1] : vector<4x64xf32> to vector<4xf32>
    %210 = vector.shape_cast %209 : vector<4xf32> to vector<4x1xf32>
    %211 = vector.broadcast %210 : vector<4x1xf32> to vector<4x64xf32>
    %212 = arith.subf %208, %211 : vector<4x64xf32>
    %213 = math.exp %212 : vector<4x64xf32>
    %cst_37 = arith.constant dense<0.000000e+00> : vector<4xf32>
    %214 = vector.multi_reduction <add>, %213, %cst_37 [1] : vector<4x64xf32> to vector<4xf32>
    %215 = vector.shape_cast %214 : vector<4xf32> to vector<4x1xf32>
    %216 = vector.broadcast %215 : vector<4x1xf32> to vector<4x64xf32>
    %217 = arith.divf %213, %216 : vector<4x64xf32>
    %218 = tpu.transpose %182, [1, 0] : vector<4x64xf32> -> vector<64x4xf32>
    %cst_38 = arith.constant dense<0.000000e+00> : vector<4x4xf32>
    %219 = tpu.matmul %217, %218, %cst_38 {dimension_numbers = #tpu.dot_dimension_numbers<[1], [0], [0], [1], [0, 0, 1, 1], [], []>} : vector<4x64xf32>, vector<64x4xf32>, vector<4x4xf32> -> vector<4x4xf32>
    %cst_39 = arith.constant dense<0xFF800000> : vector<4xf32>
    %220 = vector.multi_reduction <maximumf>, %219, %cst_39 [1] : vector<4x4xf32> to vector<4xf32>
    %221 = vector.shape_cast %220 : vector<4xf32> to vector<4x1xf32>
    %222 = vector.broadcast %221 : vector<4x1xf32> to vector<4x4xf32>
    %223 = arith.subf %219, %222 : vector<4x4xf32>
    %224 = math.exp %223 : vector<4x4xf32>
    %cst_40 = arith.constant dense<0.000000e+00> : vector<4xf32>
    %225 = vector.multi_reduction <add>, %224, %cst_40 [1] : vector<4x4xf32> to vector<4xf32>
    %226 = vector.shape_cast %225 : vector<4xf32> to vector<4x1xf32>
    %227 = vector.broadcast %226 : vector<4x1xf32> to vector<4x4xf32>
    %228 = arith.divf %224, %227 : vector<4x4xf32>
    %229 = vector.extract_strided_slice %228 {offsets = [0, 0], sizes = [4, 1], strides = [1, 1]} : vector<4x4xf32> to vector<4x1xf32>
    %230 = vector.extract_strided_slice %182 {offsets = [0, 0], sizes = [1, 64], strides = [1, 1]} : vector<4x64xf32> to vector<1x64xf32>
    %231 = vector.broadcast %229 : vector<4x1xf32> to vector<4x64xf32>
    %232 = vector.broadcast %230 : vector<1x64xf32> to vector<4x64xf32>
    %233 = arith.mulf %231, %232 : vector<4x64xf32>
    %234 = vector.extract_strided_slice %228 {offsets = [0, 1], sizes = [4, 1], strides = [1, 1]} : vector<4x4xf32> to vector<4x1xf32>
    %235 = vector.extract_strided_slice %182 {offsets = [1, 0], sizes = [1, 64], strides = [1, 1]} : vector<4x64xf32> to vector<1x64xf32>
    %236 = vector.broadcast %234 : vector<4x1xf32> to vector<4x64xf32>
    %237 = vector.broadcast %235 : vector<1x64xf32> to vector<4x64xf32>
    %238 = arith.mulf %236, %237 : vector<4x64xf32>
    %239 = arith.addf %233, %238 : vector<4x64xf32>
    %240 = vector.extract_strided_slice %228 {offsets = [0, 2], sizes = [4, 1], strides = [1, 1]} : vector<4x4xf32> to vector<4x1xf32>
    %241 = vector.extract_strided_slice %182 {offsets = [2, 0], sizes = [1, 64], strides = [1, 1]} : vector<4x64xf32> to vector<1x64xf32>
    %242 = vector.broadcast %240 : vector<4x1xf32> to vector<4x64xf32>
    %243 = vector.broadcast %241 : vector<1x64xf32> to vector<4x64xf32>
    %244 = arith.mulf %242, %243 : vector<4x64xf32>
    %245 = arith.addf %239, %244 : vector<4x64xf32>
    %246 = vector.extract_strided_slice %228 {offsets = [0, 3], sizes = [4, 1], strides = [1, 1]} : vector<4x4xf32> to vector<4x1xf32>
    %247 = vector.extract_strided_slice %182 {offsets = [3, 0], sizes = [1, 64], strides = [1, 1]} : vector<4x64xf32> to vector<1x64xf32>
    %248 = vector.broadcast %246 : vector<4x1xf32> to vector<4x64xf32>
    %249 = vector.broadcast %247 : vector<1x64xf32> to vector<4x64xf32>
    %250 = arith.mulf %248, %249 : vector<4x64xf32>
    %251 = arith.addf %245, %250 : vector<4x64xf32>
    %cst_41 = arith.constant dense<0.000000e+00> : vector<4xf32>
    %252 = vector.multi_reduction <add>, %251, %cst_41 [1] : vector<4x64xf32> to vector<4xf32>
    %253 = vector.shape_cast %252 : vector<4xf32> to vector<4x1xf32>
    %254 = vector.extract_strided_slice %253 {offsets = [0, 0], sizes = [1, 1], strides = [1, 1]} : vector<4x1xf32> to vector<1x1xf32>
    %255 = vector.extract_strided_slice %253 {offsets = [1, 0], sizes = [1, 1], strides = [1, 1]} : vector<4x1xf32> to vector<1x1xf32>
    %256 = vector.extract_strided_slice %253 {offsets = [2, 0], sizes = [1, 1], strides = [1, 1]} : vector<4x1xf32> to vector<1x1xf32>
    %257 = vector.extract_strided_slice %253 {offsets = [3, 0], sizes = [1, 1], strides = [1, 1]} : vector<4x1xf32> to vector<1x1xf32>
    %258 = arith.minimumf %254, %255 : vector<1x1xf32>
    %259 = arith.maximumf %254, %255 : vector<1x1xf32>
    %260 = arith.minimumf %256, %257 : vector<1x1xf32>
    %261 = arith.maximumf %256, %257 : vector<1x1xf32>
    %262 = arith.minimumf %258, %260 : vector<1x1xf32>
    %263 = arith.maximumf %258, %260 : vector<1x1xf32>
    %264 = arith.minimumf %259, %261 : vector<1x1xf32>
    %265 = arith.maximumf %259, %261 : vector<1x1xf32>
    %266 = arith.minimumf %264, %263 : vector<1x1xf32>
    %267 = arith.maximumf %264, %263 : vector<1x1xf32>
    %268 = arith.cmpf one, %266, %262 : vector<1x1xf32>
    %269 = arith.extui %268 : vector<1x1xi1> to vector<1x1xi32>
    %270 = arith.sitofp %269 : vector<1x1xi32> to vector<1x1xf32>
    %271 = arith.cmpf one, %267, %266 : vector<1x1xf32>
    %272 = arith.extui %271 : vector<1x1xi1> to vector<1x1xi32>
    %273 = arith.sitofp %272 : vector<1x1xi32> to vector<1x1xf32>
    %274 = arith.cmpf one, %265, %267 : vector<1x1xf32>
    %275 = arith.extui %274 : vector<1x1xi1> to vector<1x1xi32>
    %276 = arith.sitofp %275 : vector<1x1xi32> to vector<1x1xf32>
    %277 = vector.extract_strided_slice %251 {offsets = [0, 0], sizes = [1, 64], strides = [1, 1]} : vector<4x64xf32> to vector<1x64xf32>
    %278 = vector.extract_strided_slice %251 {offsets = [1, 0], sizes = [1, 64], strides = [1, 1]} : vector<4x64xf32> to vector<1x64xf32>
    %279 = vector.broadcast %270 : vector<1x1xf32> to vector<1x64xf32>
    %280 = arith.mulf %279, %278 : vector<1x64xf32>
    %281 = arith.addf %277, %280 : vector<1x64xf32>
    %282 = vector.extract_strided_slice %251 {offsets = [2, 0], sizes = [1, 64], strides = [1, 1]} : vector<4x64xf32> to vector<1x64xf32>
    %283 = vector.broadcast %273 : vector<1x1xf32> to vector<1x64xf32>
    %284 = arith.mulf %283, %282 : vector<1x64xf32>
    %285 = arith.addf %281, %284 : vector<1x64xf32>
    %286 = vector.extract_strided_slice %251 {offsets = [3, 0], sizes = [1, 64], strides = [1, 1]} : vector<4x64xf32> to vector<1x64xf32>
    %287 = vector.broadcast %276 : vector<1x1xf32> to vector<1x64xf32>
    %288 = arith.mulf %287, %286 : vector<1x64xf32>
    %289 = arith.addf %285, %288 : vector<1x64xf32>
    %cst_42 = arith.constant dense<0.000000e+00> : vector<1x256xf32>
    %290 = tpu.matmul %289, %4, %cst_42 {dimension_numbers = #tpu.dot_dimension_numbers<[1], [0], [0], [1], [0, 0, 1, 1], [], []>} : vector<1x64xf32>, vector<64x256xf32>, vector<1x256xf32> -> vector<1x256xf32>
    %291 = arith.mulf %290, %290 : vector<1x256xf32>
    %292 = vector.extract_strided_slice %5 {offsets = [0, 0], sizes = [32, 1], strides = [1, 1]} : vector<32x3xf32> to vector<32x1xf32>
    %293 = vector.extract_strided_slice %0 {offsets = [3, 0], sizes = [1, 256], strides = [1, 1]} : vector<6x256xf32> to vector<1x256xf32>
    %294 = vector.broadcast %292 : vector<32x1xf32> to vector<32x256xf32>
    %295 = vector.broadcast %293 : vector<1x256xf32> to vector<32x256xf32>
    %296 = arith.mulf %294, %295 : vector<32x256xf32>
    %297 = vector.extract_strided_slice %5 {offsets = [0, 1], sizes = [32, 1], strides = [1, 1]} : vector<32x3xf32> to vector<32x1xf32>
    %298 = vector.extract_strided_slice %0 {offsets = [4, 0], sizes = [1, 256], strides = [1, 1]} : vector<6x256xf32> to vector<1x256xf32>
    %299 = vector.broadcast %297 : vector<32x1xf32> to vector<32x256xf32>
    %300 = vector.broadcast %298 : vector<1x256xf32> to vector<32x256xf32>
    %301 = arith.mulf %299, %300 : vector<32x256xf32>
    %302 = arith.addf %296, %301 : vector<32x256xf32>
    %303 = vector.extract_strided_slice %5 {offsets = [0, 2], sizes = [32, 1], strides = [1, 1]} : vector<32x3xf32> to vector<32x1xf32>
    %304 = vector.extract_strided_slice %0 {offsets = [5, 0], sizes = [1, 256], strides = [1, 1]} : vector<6x256xf32> to vector<1x256xf32>
    %305 = vector.broadcast %303 : vector<32x1xf32> to vector<32x256xf32>
    %306 = vector.broadcast %304 : vector<1x256xf32> to vector<32x256xf32>
    %307 = arith.mulf %305, %306 : vector<32x256xf32>
    %308 = arith.addf %302, %307 : vector<32x256xf32>
    %cst_43 = arith.constant 0.000000e+00 : f32
    %309 = vector.broadcast %cst_43 : f32 to vector<32x256xf32>
    %310 = arith.maximumf %308, %309 : vector<32x256xf32>
    %cst_44 = arith.constant dense<0.000000e+00> : vector<32xf32>
    %311 = vector.multi_reduction <add>, %310, %cst_44 [1] : vector<32x256xf32> to vector<32xf32>
    %312 = vector.shape_cast %311 : vector<32xf32> to vector<32x1xf32>
    %cst_45 = arith.constant 2.560000e+02 : f32
    %313 = vector.broadcast %cst_45 : f32 to vector<32x1xf32>
    %314 = arith.divf %312, %313 : vector<32x1xf32>
    %315 = tpu.transpose %314, [1, 0] : vector<32x1xf32> -> vector<1x32xf32>
    %cst_46 = arith.constant dense<0.000000e+00> : vector<1x128xf32>
    %316 = tpu.matmul %315, %6, %cst_46 {dimension_numbers = #tpu.dot_dimension_numbers<[1], [0], [0], [1], [0, 0, 1, 1], [], []>} : vector<1x32xf32>, vector<32x128xf32>, vector<1x128xf32> -> vector<1x128xf32>
    %317 = arith.addf %316, %7 : vector<1x128xf32>
    %318 = tpu.concatenate %137, %291 in 0 : vector<1x256xf32>, vector<1x256xf32> -> vector<2x256xf32>
    %c0_47 = arith.constant 0 : index
    %c0_48 = arith.constant 0 : index
    %319 = vector.load %arg9[%c0_47, %c0_48] : memref<2x256xf32, #tpu.memory_space<vmem>>, vector<2x256xf32>
    tpu.vector_store %arg9[%c0_47, %c0_48], %318 {strides = array<i32>} : memref<2x256xf32, #tpu.memory_space<vmem>>, vector<2x256xf32>,
    %320 = tpu.concatenate %52, %206 in 0 : vector<1x128xf32>, vector<1x128xf32> -> vector<2x128xf32>
    %c0_49 = arith.constant 0 : index
    %c0_50 = arith.constant 0 : index
    %321 = vector.load %arg10[%c0_49, %c0_50] : memref<2x128xf32, #tpu.memory_space<vmem>>, vector<2x128xf32>
    tpu.vector_store %arg10[%c0_49, %c0_50], %320 {strides = array<i32>} : memref<2x128xf32, #tpu.memory_space<vmem>>, vector<2x128xf32>,
    %322 = tpu.concatenate %163, %317 in 0 : vector<1x128xf32>, vector<1x128xf32> -> vector<2x128xf32>
    %c0_51 = arith.constant 0 : index
    %c0_52 = arith.constant 0 : index
    %323 = vector.load %arg11[%c0_51, %c0_52] : memref<2x128xf32, #tpu.memory_space<vmem>>, vector<2x128xf32>
    tpu.vector_store %arg11[%c0_51, %c0_52], %322 {strides = array<i32>} : memref<2x128xf32, #tpu.memory_space<vmem>>, vector<2x128xf32>,
    return
  }
}

</mosaic_0001>

<llo_original>
// kernel: as_resnet_forward.1
$region0: #{as_resnet_forward.1}
  #allocation0 [shape = 'u32[]', space=smem, size = 0x4, offset = 0x4, fixed_abs, tag = 'smem constant byte address 0x4 - core index']
  #allocation1 [shape = 'u32[144,128]{1,0:T(1,128)}', space=vmem, size = 0x12000, scoped, tag = 'internal scratch']
  %s0 = inlined_call_operand.vmem [shape: f32[6,256], index: 0, kind: input, shape index: {}]
  %s1 = inlined_call_operand.vmem [shape: f32[256,64], index: 1, kind: input, shape index: {}]
  %s2 = inlined_call_operand.vmem [shape: f32[4,3], index: 2, kind: input, shape index: {}]
  %s3 = inlined_call_operand.vmem [shape: f32[4,128], index: 3, kind: input, shape index: {}]
  %s4 = inlined_call_operand.vmem [shape: f32[1,128], index: 4, kind: input, shape index: {}]
  %s5 = inlined_call_operand.vmem [shape: f32[64,256], index: 5, kind: input, shape index: {}]
  %s6 = inlined_call_operand.vmem [shape: f32[32,3], index: 6, kind: input, shape index: {}]
  %s7 = inlined_call_operand.vmem [shape: f32[32,128], index: 7, kind: input, shape index: {}]
  %s8 = inlined_call_operand.vmem [shape: f32[1,128], index: 8, kind: input, shape index: {}]
  %s9 = inlined_call_operand.vmem [shape: f32[2,256], index: 9, kind: output, shape index: {0}]
  %s10 = inlined_call_operand.hbm [shape: f32[2,128], index: 10, kind: output, shape index: {1}]
  %s11 = inlined_call_operand.hbm [shape: f32[2,128], index: 11, kind: output, shape index: {2}]
  %12 = xla_tuple %s9, %s10, %s11
  %s13 = sld [smem:[#allocation0]]
  $region62: #{as_resnet_forward.1} parent=0
    _
  %s15 = ssub.s32 1, %s13
  %s16 = scalar_select 0, %s15, %s13
  $region1: #{as_resnet_forward.1} parent=0
    #allocation2 [shape = 'u8[1024]{0}', space=vmem, size = 0x400, scoped, tag = 'output window, operand 1, single buffered']
    #allocation3 [shape = 's32[1]{0}', space=sflag, size = 0x4, scoped, tag = 'scoped memory for as_resnet_forward.1']
    #allocation4 [shape = 'u8[1024]{0}', space=vmem, size = 0x400, scoped, tag = 'output window, operand 2, single buffered']
    #allocation5 [shape = 's32[1]{0}', space=sflag, size = 0x4, scoped, tag = 'scoped memory for as_resnet_forward.1']
    %17 = vsyncpa [#allocation3], 0
    %18 = vsyncpa [#allocation5], 0
    // Predicated region
    $region2: #{as_resnet_forward.1} parent=1 // pred_check
      _
    $region3: #{as_resnet_forward.1} parent=1 // pred_check_branch
      %20 = sbr.rel (0) target = $region5
    $region4: #{as_resnet_forward.1} parent=1 // pred_region
      _
    $region5: #{as_resnet_forward.1} parent=1 // pred_fallthru
      _
    // Predicated region
    $region6: #{as_resnet_forward.1} parent=1 // pred_check
      _
    $region7: #{as_resnet_forward.1} parent=1 // pred_check_branch
      %22 = sbr.rel (0) target = $region9
    $region8: #{as_resnet_forward.1} parent=1 // pred_region
      _
    $region9: #{as_resnet_forward.1} parent=1 // pred_fallthru
      _
    // Predicated region
    $region10: #{as_resnet_forward.1} parent=1 // pred_check
      _
    $region11: #{as_resnet_forward.1} parent=1 // pred_check_branch
      %24 = sbr.rel (0) target = $region13
    $region12: #{as_resnet_forward.1} parent=1 // pred_region
      _
    $region13: #{as_resnet_forward.1} parent=1 // pred_fallthru
      _
    // Predicated region
    $region14: #{as_resnet_forward.1} parent=1 // pred_check
      _
    $region15: #{as_resnet_forward.1} parent=1 // pred_check_branch
      %26 = sbr.rel (0) target = $region17
    $region16: #{as_resnet_forward.1} parent=1 // pred_region
      _
    $region17: #{as_resnet_forward.1} parent=1 // pred_fallthru
      _
    // Predicated region
    $region18: #{as_resnet_forward.1} parent=1 // pred_check
      _
    $region19: #{as_resnet_forward.1} parent=1 // pred_check_branch
      %28 = sbr.rel (0) target = $region21
    $region20: #{as_resnet_forward.1} parent=1 // pred_region
      _
    $region21: #{as_resnet_forward.1} parent=1 // pred_fallthru
      _
    // Predicated region
    $region22: #{as_resnet_forward.1} parent=1 // pred_check
      _
    $region23: #{as_resnet_forward.1} parent=1 // pred_check_branch
      %30 = sbr.rel (0) target = $region25
    $region24: #{as_resnet_forward.1} parent=1 // pred_region
      _
    $region25: #{as_resnet_forward.1} parent=1 // pred_fallthru
      _
    // Predicated region
    $region26: #{as_resnet_forward.1} parent=1 // pred_check
      _
    $region27: #{as_resnet_forward.1} parent=1 // pred_check_branch
      %32 = sbr.rel (0) target = $region29
    $region28: #{as_resnet_forward.1} parent=1 // pred_region
      _
    $region29: #{as_resnet_forward.1} parent=1 // pred_fallthru
      _
    // Predicated region
    $region30: #{as_resnet_forward.1} parent=1 // pred_check
      _
    $region31: #{as_resnet_forward.1} parent=1 // pred_check_branch
      %34 = sbr.rel (0) target = $region33
    $region32: #{as_resnet_forward.1} parent=1 // pred_region
      _
    $region33: #{as_resnet_forward.1} parent=1 // pred_fallthru
      _
    // Predicated region
    $region34: #{as_resnet_forward.1} parent=1 // pred_check
      _
    $region35: #{as_resnet_forward.1} parent=1 // pred_check_branch
      %36 = sbr.rel (0) target = $region37
    $region36: #{as_resnet_forward.1} parent=1 // pred_region
      _
    $region37: #{as_resnet_forward.1} parent=1 // pred_fallthru
      _
    %v37 = vld [vmem:[%s0] sm:$0x3f]
    %v38 = vld [vmem:[%s0 + $0x8] sm:$0x3f]
    %v39 = vld [vmem:[%s2] sm:$0xf]
    %v40 = vld [vmem:[%s3] sm:$0xf]
    %v41 = vld [vmem:[%s4] sm:$0x1]
    %v42 = vld [vmem:[%s5] sm:$0xff]
    %v43 = vld [vmem:[%s5 + $0x8] sm:$0xff]
    %v44 = vld [vmem:[%s5 + $0x10] sm:$0xff]
    %v45 = vld [vmem:[%s5 + $0x18] sm:$0xff]
    %v46 = vld [vmem:[%s5 + $0x20] sm:$0xff]
    %v47 = vld [vmem:[%s5 + $0x28] sm:$0xff]
    %v48 = vld [vmem:[%s5 + $0x30] sm:$0xff]
    %v49 = vld [vmem:[%s5 + $0x38] sm:$0xff]
    %v50 = vld [vmem:[%s5 + $0x40] sm:$0xff]
    %v51 = vld [vmem:[%s5 + $0x48] sm:$0xff]
    %v52 = vld [vmem:[%s5 + $0x50] sm:$0xff]
    %v53 = vld [vmem:[%s5 + $0x58] sm:$0xff]
    %v54 = vld [vmem:[%s5 + $0x60] sm:$0xff]
    %v55 = vld [vmem:[%s5 + $0x68] sm:$0xff]
    %v56 = vld [vmem:[%s5 + $0x70] sm:$0xff]
    %v57 = vld [vmem:[%s5 + $0x78] sm:$0xff]
    %v58 = vld [vmem:[%s6] sm:$0xff]
    %v59 = vld [vmem:[%s6 + $0x8] sm:$0xff]
    %v60 = vld [vmem:[%s6 + $0x10] sm:$0xff]
    %v61 = vld [vmem:[%s6 + $0x18] sm:$0xff]
    %v62 = vld [vmem:[%s7] sm:$0xff]
    %v63 = vld [vmem:[%s7 + $0x8] sm:$0xff]
    %v64 = vld [vmem:[%s7 + $0x10] sm:$0xff]
    %v65 = vld [vmem:[%s7 + $0x18] sm:$0xff]
    %v66 = vld [vmem:[%s8] sm:$0x1]
    %v67 = vld [vmem:[%s1] sm:$0xff]
    %v68 = vld [vmem:[%s1 + $0x8] sm:$0xff]
    %v69 = vld [vmem:[%s1 + $0x10] sm:$0xff]
    %v70 = vld [vmem:[%s1 + $0x18] sm:$0xff]
    %v71 = vld [vmem:[%s1 + $0x20] sm:$0xff]
    %v72 = vld [vmem:[%s1 + $0x28] sm:$0xff]
    %v73 = vld [vmem:[%s1 + $0x30] sm:$0xff]
    %v74 = vld [vmem:[%s1 + $0x38] sm:$0xff]
    %v75 = vld [vmem:[%s1 + $0x40] sm:$0xff]
    %v76 = vld [vmem:[%s1 + $0x48] sm:$0xff]
    %v77 = vld [vmem:[%s1 + $0x50] sm:$0xff]
    %v78 = vld [vmem:[%s1 + $0x58] sm:$0xff]
    %v79 = vld [vmem:[%s1 + $0x60] sm:$0xff]
    %v80 = vld [vmem:[%s1 + $0x68] sm:$0xff]
    %v81 = vld [vmem:[%s1 + $0x70] sm:$0xff]
    %v82 = vld [vmem:[%s1 + $0x78] sm:$0xff]
    %v83 = vld [vmem:[%s1 + $0x80] sm:$0xff]
    %v84 = vld [vmem:[%s1 + $0x88] sm:$0xff]
    %v85 = vld [vmem:[%s1 + $0x90] sm:$0xff]
    %v86 = vld [vmem:[%s1 + $0x98] sm:$0xff]
    %v87 = vld [vmem:[%s1 + $0xa0] sm:$0xff]
    %v88 = vld [vmem:[%s1 + $0xa8] sm:$0xff]
    %v89 = vld [vmem:[%s1 + $0xb0] sm:$0xff]
    %v90 = vld [vmem:[%s1 + $0xb8] sm:$0xff]
    %v91 = vld [vmem:[%s1 + $0xc0] sm:$0xff]
    %v92 = vld [vmem:[%s1 + $0xc8] sm:$0xff]
    %v93 = vld [vmem:[%s1 + $0xd0] sm:$0xff]
    %v94 = vld [vmem:[%s1 + $0xd8] sm:$0xff]
    %v95 = vld [vmem:[%s1 + $0xe0] sm:$0xff]
    %v96 = vld [vmem:[%s1 + $0xe8] sm:$0xff]
    %v97 = vld [vmem:[%s1 + $0xf0] sm:$0xff]
    %v98 = vld [vmem:[%s1 + $0xf8] sm:$0xff]
    %99 = vmatprep.subr.mxu0 0.0
    %100 = vmatpush1.msra.mxu0 %v67
    %101 = vmatprep.subr.mxu0 0.0
    %102 = vmatpush1.msra.mxu0 %v68
    %103 = vmatprep.subr.mxu0 0.0
    %104 = vmatpush1.msra.mxu0 %v69
    %105 = vmatprep.subr.mxu0 0.0
    %106 = vmatpush1.msra.mxu0 %v70
    %107 = vmatprep.subr.mxu0 0.0
    %108 = vmatpush1.msra.mxu0 %v71
    %109 = vmatprep.subr.mxu0 0.0
    %110 = vmatpush1.msra.mxu0 %v72
    %111 = vmatprep.subr.mxu0 0.0
    %112 = vmatpush1.msra.mxu0 %v73
    %113 = vmatprep.subr.mxu0 0.0
    %114 = vmatpush1.msra.mxu0 %v74
    %115 = vmatprep.subr.mxu0 0.0
    %116 = vmatpush1.msra.mxu0 %v75
    %117 = vmatprep.subr.mxu0 0.0
    %118 = vmatpush1.msra.mxu0 %v76
    %119 = vmatprep.subr.mxu0 0.0
    %120 = vmatpush1.msra.mxu0 %v77
    %121 = vmatprep.subr.mxu0 0.0
    %122 = vmatpush1.msra.mxu0 %v78
    %123 = vmatprep.subr.mxu0 0.0
    %124 = vmatpush1.msra.mxu0 %v79
    %125 = vmatprep.subr.mxu0 0.0
    %126 = vmatpush1.msra.mxu0 %v80
    %127 = vmatprep.subr.mxu0 0.0
    %128 = vmatpush1.msra.mxu0 %v81
    %129 = vmatprep.subr.mxu0 0.0
    %130 = vmatpush1.msra.mxu0 %v82
    %131 = vmatprep.subr.mxu0 0.0
    %132 = vmatpush1.msra.mxu0 %v83
    %133 = vmatprep.subr.mxu0 0.0
    %134 = vmatpush1.msra.mxu0 %v84
    %135 = vmatprep.subr.mxu0 0.0
    %136 = vmatpush1.msra.mxu0 %v85
    %137 = vmatprep.subr.mxu0 0.0
    %138 = vmatpush1.msra.mxu0 %v86
    %139 = vmatprep.subr.mxu0 0.0
    %140 = vmatpush1.msra.mxu0 %v87
    %141 = vmatprep.subr.mxu0 0.0
    %142 = vmatpush1.msra.mxu0 %v88
    %143 = vmatprep.subr.mxu0 0.0
    %144 = vmatpush1.msra.mxu0 %v89
    %145 = vmatprep.subr.mxu0 0.0
    %146 = vmatpush1.msra.mxu0 %v90
    %147 = vmatprep.subr.mxu0 0.0
    %148 = vmatpush1.msra.mxu0 %v91
    %149 = vmatprep.subr.mxu0 0.0
    %150 = vmatpush1.msra.mxu0 %v92
    %151 = vmatprep.subr.mxu0 0.0
    %152 = vmatpush1.msra.mxu0 %v93
    %153 = vmatprep.subr.mxu0 0.0
    %154 = vmatpush1.msra.mxu0 %v94
    %155 = vmatprep.subr.mxu0 0.0
    %156 = vmatpush1.msra.mxu0 %v95
    %157 = vmatprep.subr.mxu0 0.0
    %158 = vmatpush1.msra.mxu0 %v96
    %159 = vmatprep.subr.mxu0 0.0
    %160 = vmatpush1.msra.mxu0 %v97
    %161 = vmatprep.subr.mxu0 0.0
    %162 = vmatpush1.msra.mxu0 %v98
    %163 = vmatprep.mubr.f32.mxu0 %v38
    %164 = vmatmul.mubr.f32.gmra.mrb[0].mxu0 %v37
    %v165 = vpop.f32.mrb[0].mxu0
    %v166 = vadd.f32 0.0, %v165
    %v167 = vpop.f32.mrb[0].mxu0
    %168 = vdwg.mxu0
    %170 = vset.pattern.permute.xlu0 0
    %171 = vperm.xlu0 %170, %v39
    %v172 = vpop.permute.xlu0 %171
    %v174 = vlaneseq
    %v175 = vshrl.u32 %v174, 7
    %v176 = vsub.s32 0, %v175
    %v177 = vrot.slane %v166, %v176
    %v178 = vmul.f32 %v172, %v177
    %179 = vset.pattern.permute.xlu0 1
    %180 = vperm.xlu0 %179, %v39
    %v181 = vpop.permute.xlu0 %180
    %v183 = vlaneseq
    %v184 = vshrl.u32 %v183, 7
    %v185 = vsub.s32 1, %v184
    %v186 = vrot.slane %v166, %v185
    %v187 = vmul.f32 %v181, %v186
    %v188 = vadd.f32 %v178, %v187
    %189 = vset.pattern.permute.xlu0 2
    %190 = vperm.xlu0 %189, %v39
    %v191 = vpop.permute.xlu0 %190
    %v193 = vlaneseq
    %v194 = vshrl.u32 %v193, 7
    %v195 = vsub.s32 2, %v194
    %v196 = vrot.slane %v166, %v195
    %v197 = vmul.f32 %v191, %v196
    %v198 = vadd.f32 %v188, %v197
    %v199 = vmax.f32 %v198, 0.0
    %vm200 = vcmask 519168
    %v201 = vsel %vm200, %v199, 0.0
    %202 = vadd.xlane.f32.xlu0 %v201
    %v203 = vpop.xlane.xlu0 %202
    %v204 = vrcp.pop 64.0
    %v205 = vmul.f32 %v203, %v204
    %v206 = vmul.f32 %v205, %v40
    %v207 = vadd.f32 %v41, %v206
    %v210 = vunpack.c.l.s4 1966171168
    %v211 = vunpack.c.0.s8 %v210
    %v212 = vlaneseq
    %v213 = vshrl.u32 %v212, 7
    %v214 = vsub.s32 %v211, %v213
    %v215 = vrot.slane %v206, %v214
    %v216 = vcombine.high %v215, %v215
    %v218 = vunpack.c.l.s4 1966171168
    %v219 = vunpack.c.0.s8 %v218
    %v220 = vlaneseq
    %v221 = vshrl.u32 %v220, 7
    %v222 = vsub.s32 %v219, %v221
    %v223 = vrot.slane %v215, %v222
    %v225 = vunpack.c.l.s4 1966171168
    %v226 = vunpack.c.0.s8 %v225
    %v227 = vlaneseq
    %v228 = vshrl.u32 %v227, 7
    %v229 = vsub.s32 %v226, %v228
    %v230 = vrot.slane %v216, %v229
    %v232 = vadd.f32 %v207, %v230
    %v233 = vcombine.high %v223, %v223
    %v235 = vadd.f32 %v232, %v233
    %v236 = vcombine.high %v230, %v230
    %v238 = vadd.f32 %v235, %v236
    %v239 = vmul.f32 %v199, 5.0
    %v240 = vsel %vm200, %v239, -inf
    %241 = vmax.xlane.f32.xlu0 %v240
    %v242 = vpop.xlane.xlu0 %241
    %v243 = vsub.f32 %v239, %v242
    %v244 = vmul.f32 %v243, 1.442695
    %v245 = vpow.pop %v244
    %v246 = vsel %vm200, %v245, 0.0
    %247 = vadd.xlane.f32.xlu0 %v246
    %v248 = vpop.xlane.xlu0 %247
    %v249 = vrcp.pop %v248
    %v250 = vmul.f32 %v245, %v249
    %vm251 = vcmask 523264
    %v253 = vsel %vm251, %v250, 0
    %v256 = vsel %vm251, %v199, 0
    %258 = vmatprep.subr.mxu0 0.0
    %259 = vmatpush1.xpose.msra.mxu0 %v256
    %260 = vmatprep.subr.mxu0 0.0
    %261 = vmatpush1.xpose.msra.mxu0 0.0
    %262 = vmatprep.subr.mxu0 0.0
    %263 = vmatpush1.xpose.msra.mxu0 0.0
    %264 = vmatprep.subr.mxu0 0.0
    %265 = vmatpush1.xpose.msra.mxu0 0.0
    %266 = vmatprep.subr.mxu0 0.0
    %267 = vmatpush1.xpose.msra.mxu0 0.0
    %268 = vmatprep.subr.mxu0 0.0
    %269 = vmatpush1.xpose.msra.mxu0 0.0
    %270 = vmatprep.subr.mxu0 0.0
    %271 = vmatpush1.xpose.msra.mxu0 0.0
    %272 = vmatprep.subr.mxu0 0.0
    %273 = vmatpush1.xpose.msra.mxu0 0.0
    %274 = vmatprep.subr.mxu0 0.0
    %275 = vmatpush1.xpose.msra.mxu0 0.0
    %276 = vmatprep.subr.mxu0 0.0
    %277 = vmatpush1.xpose.msra.mxu0 0.0
    %278 = vmatprep.subr.mxu0 0.0
    %279 = vmatpush1.xpose.msra.mxu0 0.0
    %280 = vmatprep.subr.mxu0 0.0
    %281 = vmatpush1.xpose.msra.mxu0 0.0
    %282 = vmatprep.subr.mxu0 0.0
    %283 = vmatpush1.xpose.msra.mxu0 0.0
    %284 = vmatprep.subr.mxu0 0.0
    %285 = vmatpush1.xpose.msra.mxu0 0.0
    %286 = vmatprep.subr.mxu0 0.0
    %287 = vmatpush1.xpose.msra.mxu0 0.0
    %288 = vmatprep.subr.mxu0 0.0
    %289 = vmatpush1.xpose.msra.mxu0 0.0
    %290 = vmatprep.subr.mxu0 0.0
    %291 = vmatpush1.xpose.msra.mxu0 0.0
    %292 = vmatprep.subr.mxu0 0.0
    %293 = vmatpush1.xpose.msra.mxu0 0.0
    %294 = vmatprep.subr.mxu0 0.0
    %295 = vmatpush1.xpose.msra.mxu0 0.0
    %296 = vmatprep.subr.mxu0 0.0
    %297 = vmatpush1.xpose.msra.mxu0 0.0
    %298 = vmatprep.subr.mxu0 0.0
    %299 = vmatpush1.xpose.msra.mxu0 0.0
    %300 = vmatprep.subr.mxu0 0.0
    %301 = vmatpush1.xpose.msra.mxu0 0.0
    %302 = vmatprep.subr.mxu0 0.0
    %303 = vmatpush1.xpose.msra.mxu0 0.0
    %304 = vmatprep.subr.mxu0 0.0
    %305 = vmatpush1.xpose.msra.mxu0 0.0
    %306 = vmatprep.subr.mxu0 0.0
    %307 = vmatpush1.xpose.msra.mxu0 0.0
    %308 = vmatprep.subr.mxu0 0.0
    %309 = vmatpush1.xpose.msra.mxu0 0.0
    %310 = vmatprep.subr.mxu0 0.0
    %311 = vmatpush1.xpose.msra.mxu0 0.0
    %312 = vmatprep.subr.mxu0 0.0
    %313 = vmatpush1.xpose.msra.mxu0 0.0
    %314 = vmatprep.subr.mxu0 0.0
    %315 = vmatpush1.xpose.msra.mxu0 0.0
    %316 = vmatprep.subr.mxu0 0.0
    %317 = vmatpush1.xpose.msra.mxu0 0.0
    %318 = vmatprep.subr.mxu0 0.0
    %319 = vmatpush1.xpose.msra.mxu0 0.0
    %320 = vmatprep.subr.mxu0 0.0
    %321 = vmatpush1.xpose.msra.mxu0 0.0
    %322 = vmatprep.mubr.f32.mxu0 0.0
    %323 = vmatmul.mubr.f32.gmra.mrb[0].mxu0 %v253
    %v324 = vpop.f32.mrb[0].mxu0
    %v325 = vadd.f32 0.0, %v324
    %v326 = vpop.f32.mrb[0].mxu0
    %327 = vdwg.mxu0
    %vm328 = vcmask 27648
    %v329 = vsel %vm328, %v325, -inf
    %330 = vmax.xlane.f32.xlu0 %v329
    %v331 = vpop.xlane.xlu0 %330
    %v332 = vsub.f32 %v325, %v331
    %v333 = vmul.f32 %v332, 1.442695
    %v334 = vpow.pop %v333
    %v335 = vsel %vm328, %v334, 0.0
    %336 = vadd.xlane.f32.xlu0 %v335
    %v337 = vpop.xlane.xlu0 %336
    %v338 = vrcp.pop %v337
    %v339 = vmul.f32 %v334, %v338
    %341 = vset.pattern.permute.xlu0 0
    %342 = vperm.xlu0 %341, %v339
    %v343 = vpop.permute.xlu0 %342
    %v345 = vlaneseq
    %v346 = vshrl.u32 %v345, 7
    %v347 = vsub.s32 0, %v346
    %v348 = vrot.slane %v199, %v347
    %v349 = vmul.f32 %v343, %v348
    %350 = vset.pattern.permute.xlu0 1
    %351 = vperm.xlu0 %350, %v339
    %v352 = vpop.permute.xlu0 %351
    %v354 = vlaneseq
    %v355 = vshrl.u32 %v354, 7
    %v356 = vsub.s32 1, %v355
    %v357 = vrot.slane %v199, %v356
    %v358 = vmul.f32 %v352, %v357
    %v359 = vadd.f32 %v349, %v358
    %360 = vset.pattern.permute.xlu0 2
    %361 = vperm.xlu0 %360, %v339
    %v362 = vpop.permute.xlu0 %361
    %v364 = vlaneseq
    %v365 = vshrl.u32 %v364, 7
    %v366 = vsub.s32 2, %v365
    %v367 = vrot.slane %v199, %v366
    %v368 = vmul.f32 %v362, %v367
    %v369 = vadd.f32 %v359, %v368
    %370 = vset.pattern.permute.xlu0 3
    %371 = vperm.xlu0 %370, %v339
    %v372 = vpop.permute.xlu0 %371
    %v374 = vlaneseq
    %v375 = vshrl.u32 %v374, 7
    %v376 = vsub.s32 3, %v375
    %v377 = vrot.slane %v199, %v376
    %v378 = vmul.f32 %v372, %v377
    %v379 = vadd.f32 %v369, %v378
    %v380 = vsel %vm200, %v379, 0.0
    %381 = vadd.xlane.f32.xlu0 %v380
    %v382 = vpop.xlane.xlu0 %381
    %v384 = vrot.slane %v382, 1
    %v386 = vmin.f32 %v382, %v384
    %v387 = vmax.f32 %v382, %v384
    %v389 = vrot.slane %v386, 2
    %v391 = vmin.f32 %v386, %v389
    %v392 = vmax.f32 %v386, %v389
    %v394 = vrot.slane %v387, 2
    %v396 = vmin.f32 %v387, %v394
    %v397 = vmax.f32 %v387, %v394
    %v398 = vmin.f32 %v396, %v392
    %v399 = vmax.f32 %v396, %v392
    %vm400 = vcmp.ne.f32.partialorder %v398, %v391
    %v401 = vsel %vm400, 1, 0
    %v402 = vcvt.s32.f32 %v401
    %vm403 = vcmp.ne.f32.partialorder %v399, %v398
    %v404 = vsel %vm403, 1, 0
    %v405 = vcvt.s32.f32 %v404
    %vm406 = vcmp.ne.f32.partialorder %v397, %v399
    %v407 = vsel %vm406, 1, 0
    %v408 = vcvt.s32.f32 %v407
    %410 = vset.pattern.permute.xlu0 0
    %411 = vperm.xlu0 %410, %v402
    %v412 = vpop.permute.xlu0 %411
    %v415 = vrot.slane %v379, 1
    %v417 = vmul.f32 %v412, %v415
    %v418 = vadd.f32 %v379, %v417
    %420 = vset.pattern.permute.xlu0 0
    %421 = vperm.xlu0 %420, %v405
    %v422 = vpop.permute.xlu0 %421
    %v424 = vrot.slane %v379, 2
    %v426 = vmul.f32 %v422, %v424
    %v427 = vadd.f32 %v418, %v426
    %429 = vset.pattern.permute.xlu0 0
    %430 = vperm.xlu0 %429, %v408
    %v431 = vpop.permute.xlu0 %430
    %v433 = vrot.slane %v379, 3
    %v435 = vmul.f32 %v431, %v433
    %v436 = vadd.f32 %v427, %v435
    %v438 = vsel %vm251, %v436, 0
    %440 = vmatprep.subr.mxu0 %v43
    %441 = vmatpush1.msra.mxu0 %v42
    %442 = vmatprep.subr.mxu0 %v45
    %443 = vmatpush1.msra.mxu0 %v44
    %444 = vmatprep.subr.mxu0 %v47
    %445 = vmatpush1.msra.mxu0 %v46
    %446 = vmatprep.subr.mxu0 %v49
    %447 = vmatpush1.msra.mxu0 %v48
    %448 = vmatprep.subr.mxu0 %v51
    %449 = vmatpush1.msra.mxu0 %v50
    %450 = vmatprep.subr.mxu0 %v53
    %451 = vmatpush1.msra.mxu0 %v52
    %452 = vmatprep.subr.mxu0 %v55
    %453 = vmatpush1.msra.mxu0 %v54
    %454 = vmatprep.subr.mxu0 %v57
    %455 = vmatpush1.msra.mxu0 %v56
    %456 = vmatprep.subr.mxu0 0.0
    %457 = vmatpush1.msra.mxu0 0.0
    %458 = vmatprep.subr.mxu0 0.0
    %459 = vmatpush1.msra.mxu0 0.0
    %460 = vmatprep.subr.mxu0 0.0
    %461 = vmatpush1.msra.mxu0 0.0
    %462 = vmatprep.subr.mxu0 0.0
    %463 = vmatpush1.msra.mxu0 0.0
    %464 = vmatprep.subr.mxu0 0.0
    %465 = vmatpush1.msra.mxu0 0.0
    %466 = vmatprep.subr.mxu0 0.0
    %467 = vmatpush1.msra.mxu0 0.0
    %468 = vmatprep.subr.mxu0 0.0
    %469 = vmatpush1.msra.mxu0 0.0
    %470 = vmatprep.subr.mxu0 0.0
    %471 = vmatpush1.msra.mxu0 0.0
    %472 = vmatprep.subr.mxu0 0.0
    %473 = vmatpush1.msra.mxu0 0.0
    %474 = vmatprep.subr.mxu0 0.0
    %475 = vmatpush1.msra.mxu0 0.0
    %476 = vmatprep.subr.mxu0 0.0
    %477 = vmatpush1.msra.mxu0 0.0
    %478 = vmatprep.subr.mxu0 0.0
    %479 = vmatpush1.msra.mxu0 0.0
    %480 = vmatprep.subr.mxu0 0.0
    %481 = vmatpush1.msra.mxu0 0.0
    %482 = vmatprep.subr.mxu0 0.0
    %483 = vmatpush1.msra.mxu0 0.0
    %484 = vmatprep.subr.mxu0 0.0
    %485 = vmatpush1.msra.mxu0 0.0
    %486 = vmatprep.subr.mxu0 0.0
    %487 = vmatpush1.msra.mxu0 0.0
    %488 = vmatprep.subr.mxu0 0.0
    %489 = vmatpush1.msra.mxu0 0.0
    %490 = vmatprep.subr.mxu0 0.0
    %491 = vmatpush1.msra.mxu0 0.0
    %492 = vmatprep.subr.mxu0 0.0
    %493 = vmatpush1.msra.mxu0 0.0
    %494 = vmatprep.subr.mxu0 0.0
    %495 = vmatpush1.msra.mxu0 0.0
    %496 = vmatprep.subr.mxu0 0.0
    %497 = vmatpush1.msra.mxu0 0.0
    %498 = vmatprep.subr.mxu0 0.0
    %499 = vmatpush1.msra.mxu0 0.0
    %500 = vmatprep.subr.mxu0 0.0
    %501 = vmatpush1.msra.mxu0 0.0
    %502 = vmatprep.subr.mxu0 0.0
    %503 = vmatpush1.msra.mxu0 0.0
    %504 = vmatprep.mubr.f32.mxu0 0.0
    %505 = vmatmul.mubr.f32.gmra.mrb[0].mxu0 %v438
    %v506 = vpop.f32.mrb[0].mxu0
    %v507 = vadd.f32 0.0, %v506
    %v508 = vpop.f32.mrb[0].mxu0
    %v509 = vadd.f32 0.0, %v508
    %510 = vdwg.mxu0
    %v511 = vmul.f32 %v507, %v507
    %v512 = vmul.f32 %v509, %v509
    %514 = vset.pattern.permute.xlu0 0
    %515 = vperm.xlu0 %514, %v58
    %v516 = vpop.permute.xlu0 %515
    %519 = vset.pattern.permute.xlu0 0
    %520 = vperm.xlu0 %519, %v59
    %v521 = vpop.permute.xlu0 %520
    %524 = vset.pattern.permute.xlu0 0
    %525 = vperm.xlu0 %524, %v60
    %v526 = vpop.permute.xlu0 %525
    %529 = vset.pattern.permute.xlu0 0
    %530 = vperm.xlu0 %529, %v61
    %v531 = vpop.permute.xlu0 %530
    %v533 = vlaneseq
    %v534 = vshrl.u32 %v533, 7
    %v535 = vsub.s32 0, %v534
    %v536 = vrot.slane %v37, %v535
    %v537 = vlaneseq
    %v538 = vshrl.u32 %v537, 7
    %v539 = vsub.s32 0, %v538
    %v540 = vrot.slane %v38, %v539
    %v541 = vmul.f32 %v516, %v536
    %v542 = vmul.f32 %v516, %v540
    %v543 = vmul.f32 %v521, %v536
    %v544 = vmul.f32 %v521, %v540
    %v545 = vmul.f32 %v526, %v536
    %v546 = vmul.f32 %v526, %v540
    %v547 = vmul.f32 %v531, %v536
    %v548 = vmul.f32 %v531, %v540
    %549 = vset.pattern.permute.xlu0 1
    %550 = vperm.xlu0 %549, %v58
    %v551 = vpop.permute.xlu0 %550
    %553 = vset.pattern.permute.xlu0 1
    %554 = vperm.xlu0 %553, %v59
    %v555 = vpop.permute.xlu0 %554
    %557 = vset.pattern.permute.xlu0 1
    %558 = vperm.xlu0 %557, %v60
    %v559 = vpop.permute.xlu0 %558
    %561 = vset.pattern.permute.xlu0 1
    %562 = vperm.xlu0 %561, %v61
    %v563 = vpop.permute.xlu0 %562
    %v565 = vlaneseq
    %v566 = vshrl.u32 %v565, 7
    %v567 = vsub.s32 1, %v566
    %v568 = vrot.slane %v37, %v567
    %v569 = vlaneseq
    %v570 = vshrl.u32 %v569, 7
    %v571 = vsub.s32 1, %v570
    %v572 = vrot.slane %v38, %v571
    %v573 = vmul.f32 %v551, %v568
    %v574 = vmul.f32 %v551, %v572
    %v575 = vmul.f32 %v555, %v568
    %v576 = vmul.f32 %v555, %v572
    %v577 = vmul.f32 %v559, %v568
    %v578 = vmul.f32 %v559, %v572
    %v579 = vmul.f32 %v563, %v568
    %v580 = vmul.f32 %v563, %v572
    %v581 = vadd.f32 %v541, %v573
    %v582 = vadd.f32 %v542, %v574
    %v583 = vadd.f32 %v543, %v575
    %v584 = vadd.f32 %v544, %v576
    %v585 = vadd.f32 %v545, %v577
    %v586 = vadd.f32 %v546, %v578
    %v587 = vadd.f32 %v547, %v579
    %v588 = vadd.f32 %v548, %v580
    %589 = vset.pattern.permute.xlu0 2
    %590 = vperm.xlu0 %589, %v58
    %v591 = vpop.permute.xlu0 %590
    %593 = vset.pattern.permute.xlu0 2
    %594 = vperm.xlu0 %593, %v59
    %v595 = vpop.permute.xlu0 %594
    %597 = vset.pattern.permute.xlu0 2
    %598 = vperm.xlu0 %597, %v60
    %v599 = vpop.permute.xlu0 %598
    %601 = vset.pattern.permute.xlu0 2
    %602 = vperm.xlu0 %601, %v61
    %v603 = vpop.permute.xlu0 %602
    %v605 = vlaneseq
    %v606 = vshrl.u32 %v605, 7
    %v607 = vsub.s32 2, %v606
    %v608 = vrot.slane %v37, %v607
    %v609 = vlaneseq
    %v610 = vshrl.u32 %v609, 7
    %v611 = vsub.s32 2, %v610
    %v612 = vrot.slane %v38, %v611
    %v613 = vmul.f32 %v591, %v608
    %v614 = vmul.f32 %v591, %v612
    %v615 = vmul.f32 %v595, %v608
    %v616 = vmul.f32 %v595, %v612
    %v617 = vmul.f32 %v599, %v608
    %v618 = vmul.f32 %v599, %v612
    %v619 = vmul.f32 %v603, %v608
    %v620 = vmul.f32 %v603, %v612
    %v621 = vadd.f32 %v581, %v613
    %v622 = vadd.f32 %v582, %v614
    %v623 = vadd.f32 %v583, %v615
    %v624 = vadd.f32 %v584, %v616
    %v625 = vadd.f32 %v585, %v617
    %v626 = vadd.f32 %v586, %v618
    %v627 = vadd.f32 %v587, %v619
    %v628 = vadd.f32 %v588, %v620
    %v629 = vmax.f32 %v621, 0.0
    %v630 = vmax.f32 %v622, 0.0
    %v631 = vmax.f32 %v623, 0.0
    %v632 = vmax.f32 %v624, 0.0
    %v633 = vmax.f32 %v625, 0.0
    %v634 = vmax.f32 %v626, 0.0
    %v635 = vmax.f32 %v627, 0.0
    %v636 = vmax.f32 %v628, 0.0
    %v637 = vadd.f32 %v629, %v630
    %638 = vadd.xlane.f32.xlu0 %v637
    %v639 = vpop.xlane.xlu0 %638
    %v640 = vadd.f32 %v631, %v632
    %641 = vadd.xlane.f32.xlu0 %v640
    %v642 = vpop.xlane.xlu0 %641
    %v643 = vadd.f32 %v633, %v634
    %644 = vadd.xlane.f32.xlu0 %v643
    %v645 = vpop.xlane.xlu0 %644
    %v646 = vadd.f32 %v635, %v636
    %647 = vadd.xlane.f32.xlu0 %v646
    %v648 = vpop.xlane.xlu0 %647
    %v649 = vrcp.pop 256.0
    %v650 = vmul.f32 %v639, %v649
    %v651 = vmul.f32 %v642, %v649
    %v652 = vmul.f32 %v645, %v649
    %v653 = vmul.f32 %v648, %v649
    %654 = vxpose.xlu0.b32.start [1/16] %v650, 128
    %655 = vxpose.xlu0.b32.cont [2/16] %v651, 128
    %656 = vxpose.xlu0.b32.cont [3/16] %v652, 128
    %657 = vxpose.xlu0.b32.cont [4/16] %v653, 128
    %658 = vxpose.xlu0.b32.cont [5/16] 0.0, 128
    %659 = vxpose.xlu0.b32.cont [6/16] 0.0, 128
    %660 = vxpose.xlu0.b32.cont [7/16] 0.0, 128
    %661 = vxpose.xlu0.b32.cont [8/16] 0.0, 128
    %662 = vxpose.xlu0.b32.cont [9/16] 0.0, 128
    %663 = vxpose.xlu0.b32.cont [10/16] 0.0, 128
    %664 = vxpose.xlu0.b32.cont [11/16] 0.0, 128
    %665 = vxpose.xlu0.b32.cont [12/16] 0.0, 128
    %666 = vxpose.xlu0.b32.cont [13/16] 0.0, 128
    %667 = vxpose.xlu0.b32.cont [14/16] 0.0, 128
    %668 = vxpose.xlu0.b32.cont [15/16] 0.0, 128
    %669 = vxpose.xlu0.b32.end [16/16] 0.0, 128
    %v670 = vpop.trf.xlu0
    %v671 = vpop.trf.xlu0
    %v672 = vpop.trf.xlu0
    %v673 = vpop.trf.xlu0
    %v674 = vpop.trf.xlu0
    %v675 = vpop.trf.xlu0
    %v676 = vpop.trf.xlu0
    %v677 = vpop.trf.xlu0
    %v678 = vpop.trf.xlu0
    %v679 = vpop.trf.xlu0
    %v680 = vpop.trf.xlu0
    %v681 = vpop.trf.xlu0
    %v682 = vpop.trf.xlu0
    %v683 = vpop.trf.xlu0
    %v684 = vpop.trf.xlu0
    %v685 = vpop.trf.xlu0
    %vm686 = vcmask 261120
    %v688 = vsel %vm686, %v670, 0
    %690 = vmatprep.subr.mxu0 0.0
    %691 = vmatpush1.msra.mxu0 %v62
    %692 = vmatprep.subr.mxu0 0.0
    %693 = vmatpush1.msra.mxu0 %v63
    %694 = vmatprep.subr.mxu0 0.0
    %695 = vmatpush1.msra.mxu0 %v64
    %696 = vmatprep.subr.mxu0 0.0
    %697 = vmatpush1.msra.mxu0 %v65
    %698 = vmatprep.subr.mxu0 0.0
    %699 = vmatpush1.msra.mxu0 0.0
    %700 = vmatprep.subr.mxu0 0.0
    %701 = vmatpush1.msra.mxu0 0.0
    %702 = vmatprep.subr.mxu0 0.0
    %703 = vmatpush1.msra.mxu0 0.0
    %704 = vmatprep.subr.mxu0 0.0
    %705 = vmatpush1.msra.mxu0 0.0
    %706 = vmatprep.subr.mxu0 0.0
    %707 = vmatpush1.msra.mxu0 0.0
    %708 = vmatprep.subr.mxu0 0.0
    %709 = vmatpush1.msra.mxu0 0.0
    %710 = vmatprep.subr.mxu0 0.0
    %711 = vmatpush1.msra.mxu0 0.0
    %712 = vmatprep.subr.mxu0 0.0
    %713 = vmatpush1.msra.mxu0 0.0
    %714 = vmatprep.subr.mxu0 0.0
    %715 = vmatpush1.msra.mxu0 0.0
    %716 = vmatprep.subr.mxu0 0.0
    %717 = vmatpush1.msra.mxu0 0.0
    %718 = vmatprep.subr.mxu0 0.0
    %719 = vmatpush1.msra.mxu0 0.0
    %720 = vmatprep.subr.mxu0 0.0
    %721 = vmatpush1.msra.mxu0 0.0
    %722 = vmatprep.subr.mxu0 0.0
    %723 = vmatpush1.msra.mxu0 0.0
    %724 = vmatprep.subr.mxu0 0.0
    %725 = vmatpush1.msra.mxu0 0.0
    %726 = vmatprep.subr.mxu0 0.0
    %727 = vmatpush1.msra.mxu0 0.0
    %728 = vmatprep.subr.mxu0 0.0
    %729 = vmatpush1.msra.mxu0 0.0
    %730 = vmatprep.subr.mxu0 0.0
    %731 = vmatpush1.msra.mxu0 0.0
    %732 = vmatprep.subr.mxu0 0.0
    %733 = vmatpush1.msra.mxu0 0.0
    %734 = vmatprep.subr.mxu0 0.0
    %735 = vmatpush1.msra.mxu0 0.0
    %736 = vmatprep.subr.mxu0 0.0
    %737 = vmatpush1.msra.mxu0 0.0
    %738 = vmatprep.subr.mxu0 0.0
    %739 = vmatpush1.msra.mxu0 0.0
    %740 = vmatprep.subr.mxu0 0.0
    %741 = vmatpush1.msra.mxu0 0.0
    %742 = vmatprep.subr.mxu0 0.0
    %743 = vmatpush1.msra.mxu0 0.0
    %744 = vmatprep.subr.mxu0 0.0
    %745 = vmatpush1.msra.mxu0 0.0
    %746 = vmatprep.subr.mxu0 0.0
    %747 = vmatpush1.msra.mxu0 0.0
    %748 = vmatprep.subr.mxu0 0.0
    %749 = vmatpush1.msra.mxu0 0.0
    %750 = vmatprep.subr.mxu0 0.0
    %751 = vmatpush1.msra.mxu0 0.0
    %752 = vmatprep.subr.mxu0 0.0
    %753 = vmatpush1.msra.mxu0 0.0
    %754 = vmatprep.mubr.f32.mxu0 0.0
    %755 = vmatmul.mubr.f32.gmra.mrb[0].mxu0 %v688
    %v756 = vpop.f32.mrb[0].mxu0
    %v757 = vadd.f32 %v66, %v756
    %v758 = vpop.f32.mrb[0].mxu0
    %759 = vdwg.mxu0
    %v760 = vlaneseq
    %v761 = vshrl.u32 %v760, 7
    %v762 = vsub.s32 3, %v761
    %v763 = vrot.slane %v166, %v762
    %v764 = vmul.f32 %v172, %v763
    %v765 = vlaneseq
    %v766 = vshrl.u32 %v765, 7
    %v767 = vsub.s32 4, %v766
    %v768 = vrot.slane %v166, %v767
    %v769 = vmul.f32 %v181, %v768
    %v770 = vadd.f32 %v764, %v769
    %v771 = vlaneseq
    %v772 = vshrl.u32 %v771, 7
    %v773 = vsub.s32 5, %v772
    %v774 = vrot.slane %v166, %v773
    %v775 = vmul.f32 %v191, %v774
    %v776 = vadd.f32 %v770, %v775
    %v777 = vmax.f32 %v776, 0.0
    %v778 = vsel %vm200, %v777, 0.0
    %779 = vadd.xlane.f32.xlu0 %v778
    %v780 = vpop.xlane.xlu0 %779
    %v781 = vmul.f32 %v780, %v204
    %v782 = vmul.f32 %v781, %v40
    %v783 = vadd.f32 %v41, %v782
    %v786 = vunpack.c.l.s4 1966171168
    %v787 = vunpack.c.0.s8 %v786
    %v788 = vlaneseq
    %v789 = vshrl.u32 %v788, 7
    %v790 = vsub.s32 %v787, %v789
    %v791 = vrot.slane %v782, %v790
    %v792 = vcombine.high %v791, %v791
    %v794 = vunpack.c.l.s4 1966171168
    %v795 = vunpack.c.0.s8 %v794
    %v796 = vlaneseq
    %v797 = vshrl.u32 %v796, 7
    %v798 = vsub.s32 %v795, %v797
    %v799 = vrot.slane %v791, %v798
    %v801 = vunpack.c.l.s4 1966171168
    %v802 = vunpack.c.0.s8 %v801
    %v803 = vlaneseq
    %v804 = vshrl.u32 %v803, 7
    %v805 = vsub.s32 %v802, %v804
    %v806 = vrot.slane %v792, %v805
    %v808 = vadd.f32 %v783, %v806
    %v809 = vcombine.high %v799, %v799
    %v811 = vadd.f32 %v808, %v809
    %v812 = vcombine.high %v806, %v806
    %v814 = vadd.f32 %v811, %v812
    %v815 = vmul.f32 %v777, 5.0
    %v816 = vsel %vm200, %v815, -inf
    %817 = vmax.xlane.f32.xlu0 %v816
    %v818 = vpop.xlane.xlu0 %817
    %v819 = vsub.f32 %v815, %v818
    %v820 = vmul.f32 %v819, 1.442695
    %v821 = vpow.pop %v820
    %v822 = vsel %vm200, %v821, 0.0
    %823 = vadd.xlane.f32.xlu0 %v822
    %v824 = vpop.xlane.xlu0 %823
    %v825 = vrcp.pop %v824
    %v826 = vmul.f32 %v821, %v825
    %v828 = vsel %vm251, %v826, 0
    %v831 = vsel %vm251, %v777, 0
    %833 = vmatprep.subr.mxu0 0.0
    %834 = vmatpush1.xpose.msra.mxu0 %v831
    %835 = vmatprep.subr.mxu0 0.0
    %836 = vmatpush1.xpose.msra.mxu0 0.0
    %837 = vmatprep.subr.mxu0 0.0
    %838 = vmatpush1.xpose.msra.mxu0 0.0
    %839 = vmatprep.subr.mxu0 0.0
    %840 = vmatpush1.xpose.msra.mxu0 0.0
    %841 = vmatprep.subr.mxu0 0.0
    %842 = vmatpush1.xpose.msra.mxu0 0.0
    %843 = vmatprep.subr.mxu0 0.0
    %844 = vmatpush1.xpose.msra.mxu0 0.0
    %845 = vmatprep.subr.mxu0 0.0
    %846 = vmatpush1.xpose.msra.mxu0 0.0
    %847 = vmatprep.subr.mxu0 0.0
    %848 = vmatpush1.xpose.msra.mxu0 0.0
    %849 = vmatprep.subr.mxu0 0.0
    %850 = vmatpush1.xpose.msra.mxu0 0.0
    %851 = vmatprep.subr.mxu0 0.0
    %852 = vmatpush1.xpose.msra.mxu0 0.0
    %853 = vmatprep.subr.mxu0 0.0
    %854 = vmatpush1.xpose.msra.mxu0 0.0
    %855 = vmatprep.subr.mxu0 0.0
    %856 = vmatpush1.xpose.msra.mxu0 0.0
    %857 = vmatprep.subr.mxu0 0.0
    %858 = vmatpush1.xpose.msra.mxu0 0.0
    %859 = vmatprep.subr.mxu0 0.0
    %860 = vmatpush1.xpose.msra.mxu0 0.0
    %861 = vmatprep.subr.mxu0 0.0
    %862 = vmatpush1.xpose.msra.mxu0 0.0
    %863 = vmatprep.subr.mxu0 0.0
    %864 = vmatpush1.xpose.msra.mxu0 0.0
    %865 = vmatprep.subr.mxu0 0.0
    %866 = vmatpush1.xpose.msra.mxu0 0.0
    %867 = vmatprep.subr.mxu0 0.0
    %868 = vmatpush1.xpose.msra.mxu0 0.0
    %869 = vmatprep.subr.mxu0 0.0
    %870 = vmatpush1.xpose.msra.mxu0 0.0
    %871 = vmatprep.subr.mxu0 0.0
    %872 = vmatpush1.xpose.msra.mxu0 0.0
    %873 = vmatprep.subr.mxu0 0.0
    %874 = vmatpush1.xpose.msra.mxu0 0.0
    %875 = vmatprep.subr.mxu0 0.0
    %876 = vmatpush1.xpose.msra.mxu0 0.0
    %877 = vmatprep.subr.mxu0 0.0
    %878 = vmatpush1.xpose.msra.mxu0 0.0
    %879 = vmatprep.subr.mxu0 0.0
    %880 = vmatpush1.xpose.msra.mxu0 0.0
    %881 = vmatprep.subr.mxu0 0.0
    %882 = vmatpush1.xpose.msra.mxu0 0.0
    %883 = vmatprep.subr.mxu0 0.0
    %884 = vmatpush1.xpose.msra.mxu0 0.0
    %885 = vmatprep.subr.mxu0 0.0
    %886 = vmatpush1.xpose.msra.mxu0 0.0
    %887 = vmatprep.subr.mxu0 0.0
    %888 = vmatpush1.xpose.msra.mxu0 0.0
    %889 = vmatprep.subr.mxu0 0.0
    %890 = vmatpush1.xpose.msra.mxu0 0.0
    %891 = vmatprep.subr.mxu0 0.0
    %892 = vmatpush1.xpose.msra.mxu0 0.0
    %893 = vmatprep.subr.mxu0 0.0
    %894 = vmatpush1.xpose.msra.mxu0 0.0
    %895 = vmatprep.subr.mxu0 0.0
    %896 = vmatpush1.xpose.msra.mxu0 0.0
    %897 = vmatprep.mubr.f32.mxu0 0.0
    %898 = vmatmul.mubr.f32.gmra.mrb[0].mxu0 %v828
    %v899 = vpop.f32.mrb[0].mxu0
    %v900 = vadd.f32 0.0, %v899
    %v901 = vpop.f32.mrb[0].mxu0
    %902 = vdwg.mxu0
    %v903 = vsel %vm328, %v900, -inf
    %904 = vmax.xlane.f32.xlu0 %v903
    %v905 = vpop.xlane.xlu0 %904
    %v906 = vsub.f32 %v900, %v905
    %v907 = vmul.f32 %v906, 1.442695
    %v908 = vpow.pop %v907
    %v909 = vsel %vm328, %v908, 0.0
    %910 = vadd.xlane.f32.xlu0 %v909
    %v911 = vpop.xlane.xlu0 %910
    %v912 = vrcp.pop %v911
    %v913 = vmul.f32 %v908, %v912
    %915 = vset.pattern.permute.xlu0 0
    %916 = vperm.xlu0 %915, %v913
    %v917 = vpop.permute.xlu0 %916
    %v919 = vlaneseq
    %v920 = vshrl.u32 %v919, 7
    %v921 = vsub.s32 0, %v920
    %v922 = vrot.slane %v777, %v921
    %v923 = vmul.f32 %v917, %v922
    %924 = vset.pattern.permute.xlu0 1
    %925 = vperm.xlu0 %924, %v913
    %v926 = vpop.permute.xlu0 %925
    %v928 = vlaneseq
    %v929 = vshrl.u32 %v928, 7
    %v930 = vsub.s32 1, %v929
    %v931 = vrot.slane %v777, %v930
    %v932 = vmul.f32 %v926, %v931
    %v933 = vadd.f32 %v923, %v932
    %934 = vset.pattern.permute.xlu0 2
    %935 = vperm.xlu0 %934, %v913
    %v936 = vpop.permute.xlu0 %935
    %v938 = vlaneseq
    %v939 = vshrl.u32 %v938, 7
    %v940 = vsub.s32 2, %v939
    %v941 = vrot.slane %v777, %v940
    %v942 = vmul.f32 %v936, %v941
    %v943 = vadd.f32 %v933, %v942
    %944 = vset.pattern.permute.xlu0 3
    %945 = vperm.xlu0 %944, %v913
    %v946 = vpop.permute.xlu0 %945
    %v948 = vlaneseq
    %v949 = vshrl.u32 %v948, 7
    %v950 = vsub.s32 3, %v949
    %v951 = vrot.slane %v777, %v950
    %v952 = vmul.f32 %v946, %v951
    %v953 = vadd.f32 %v943, %v952
    %v954 = vsel %vm200, %v953, 0.0
    %955 = vadd.xlane.f32.xlu0 %v954
    %v956 = vpop.xlane.xlu0 %955
    %v958 = vrot.slane %v956, 1
    %v960 = vmin.f32 %v956, %v958
    %v961 = vmax.f32 %v956, %v958
    %v963 = vrot.slane %v960, 2
    %v965 = vmin.f32 %v960, %v963
    %v966 = vmax.f32 %v960, %v963
    %v968 = vrot.slane %v961, 2
    %v970 = vmin.f32 %v961, %v968
    %v971 = vmax.f32 %v961, %v968
    %v972 = vmin.f32 %v970, %v966
    %v973 = vmax.f32 %v970, %v966
    %vm974 = vcmp.ne.f32.partialorder %v972, %v965
    %v975 = vsel %vm974, 1, 0
    %v976 = vcvt.s32.f32 %v975
    %vm977 = vcmp.ne.f32.partialorder %v973, %v972
    %v978 = vsel %vm977, 1, 0
    %v979 = vcvt.s32.f32 %v978
    %vm980 = vcmp.ne.f32.partialorder %v971, %v973
    %v981 = vsel %vm980, 1, 0
    %v982 = vcvt.s32.f32 %v981
    %984 = vset.pattern.permute.xlu0 0
    %985 = vperm.xlu0 %984, %v976
    %v986 = vpop.permute.xlu0 %985
    %v989 = vrot.slane %v953, 1
    %v991 = vmul.f32 %v986, %v989
    %v992 = vadd.f32 %v953, %v991
    %994 = vset.pattern.permute.xlu0 0
    %995 = vperm.xlu0 %994, %v979
    %v996 = vpop.permute.xlu0 %995
    %v998 = vrot.slane %v953, 2
    %v1000 = vmul.f32 %v996, %v998
    %v1001 = vadd.f32 %v992, %v1000
    %1003 = vset.pattern.permute.xlu0 0
    %1004 = vperm.xlu0 %1003, %v982
    %v1005 = vpop.permute.xlu0 %1004
    %v1007 = vrot.slane %v953, 3
    %v1009 = vmul.f32 %v1005, %v1007
    %v1010 = vadd.f32 %v1001, %v1009
    %v1012 = vsel %vm251, %v1010, 0
    %1014 = vmatprep.subr.mxu0 %v43
    %1015 = vmatpush1.msra.mxu0 %v42
    %1016 = vmatprep.subr.mxu0 %v45
    %1017 = vmatpush1.msra.mxu0 %v44
    %1018 = vmatprep.subr.mxu0 %v47
    %1019 = vmatpush1.msra.mxu0 %v46
    %1020 = vmatprep.subr.mxu0 %v49
    %1021 = vmatpush1.msra.mxu0 %v48
    %1022 = vmatprep.subr.mxu0 %v51
    %1023 = vmatpush1.msra.mxu0 %v50
    %1024 = vmatprep.subr.mxu0 %v53
    %1025 = vmatpush1.msra.mxu0 %v52
    %1026 = vmatprep.subr.mxu0 %v55
    %1027 = vmatpush1.msra.mxu0 %v54
    %1028 = vmatprep.subr.mxu0 %v57
    %1029 = vmatpush1.msra.mxu0 %v56
    %1030 = vmatprep.subr.mxu0 0.0
    %1031 = vmatpush1.msra.mxu0 0.0
    %1032 = vmatprep.subr.mxu0 0.0
    %1033 = vmatpush1.msra.mxu0 0.0
    %1034 = vmatprep.subr.mxu0 0.0
    %1035 = vmatpush1.msra.mxu0 0.0
    %1036 = vmatprep.subr.mxu0 0.0
    %1037 = vmatpush1.msra.mxu0 0.0
    %1038 = vmatprep.subr.mxu0 0.0
    %1039 = vmatpush1.msra.mxu0 0.0
    %1040 = vmatprep.subr.mxu0 0.0
    %1041 = vmatpush1.msra.mxu0 0.0
    %1042 = vmatprep.subr.mxu0 0.0
    %1043 = vmatpush1.msra.mxu0 0.0
    %1044 = vmatprep.subr.mxu0 0.0
    %1045 = vmatpush1.msra.mxu0 0.0
    %1046 = vmatprep.subr.mxu0 0.0
    %1047 = vmatpush1.msra.mxu0 0.0
    %1048 = vmatprep.subr.mxu0 0.0
    %1049 = vmatpush1.msra.mxu0 0.0
    %1050 = vmatprep.subr.mxu0 0.0
    %1051 = vmatpush1.msra.mxu0 0.0
    %1052 = vmatprep.subr.mxu0 0.0
    %1053 = vmatpush1.msra.mxu0 0.0
    %1054 = vmatprep.subr.mxu0 0.0
    %1055 = vmatpush1.msra.mxu0 0.0
    %1056 = vmatprep.subr.mxu0 0.0
    %1057 = vmatpush1.msra.mxu0 0.0
    %1058 = vmatprep.subr.mxu0 0.0
    %1059 = vmatpush1.msra.mxu0 0.0
    %1060 = vmatprep.subr.mxu0 0.0
    %1061 = vmatpush1.msra.mxu0 0.0
    %1062 = vmatprep.subr.mxu0 0.0
    %1063 = vmatpush1.msra.mxu0 0.0
    %1064 = vmatprep.subr.mxu0 0.0
    %1065 = vmatpush1.msra.mxu0 0.0
    %1066 = vmatprep.subr.mxu0 0.0
    %1067 = vmatpush1.msra.mxu0 0.0
    %1068 = vmatprep.subr.mxu0 0.0
    %1069 = vmatpush1.msra.mxu0 0.0
    %1070 = vmatprep.subr.mxu0 0.0
    %1071 = vmatpush1.msra.mxu0 0.0
    %1072 = vmatprep.subr.mxu0 0.0
    %1073 = vmatpush1.msra.mxu0 0.0
    %1074 = vmatprep.subr.mxu0 0.0
    %1075 = vmatpush1.msra.mxu0 0.0
    %1076 = vmatprep.subr.mxu0 0.0
    %1077 = vmatpush1.msra.mxu0 0.0
    %1078 = vmatprep.mubr.f32.mxu0 0.0
    %1079 = vmatmul.mubr.f32.gmra.mrb[0].mxu0 %v1012
    %v1080 = vpop.f32.mrb[0].mxu0
    %v1081 = vadd.f32 0.0, %v1080
    %v1082 = vpop.f32.mrb[0].mxu0
    %v1083 = vadd.f32 0.0, %v1082
    %1084 = vdwg.mxu0
    %v1085 = vmul.f32 %v1081, %v1081
    %v1086 = vmul.f32 %v1083, %v1083
    %v1087 = vlaneseq
    %v1088 = vshrl.u32 %v1087, 7
    %v1089 = vsub.s32 3, %v1088
    %v1090 = vrot.slane %v37, %v1089
    %v1091 = vlaneseq
    %v1092 = vshrl.u32 %v1091, 7
    %v1093 = vsub.s32 3, %v1092
    %v1094 = vrot.slane %v38, %v1093
    %v1095 = vmul.f32 %v516, %v1090
    %v1096 = vmul.f32 %v516, %v1094
    %v1097 = vmul.f32 %v521, %v1090
    %v1098 = vmul.f32 %v521, %v1094
    %v1099 = vmul.f32 %v526, %v1090
    %v1100 = vmul.f32 %v526, %v1094
    %v1101 = vmul.f32 %v531, %v1090
    %v1102 = vmul.f32 %v531, %v1094
    %v1103 = vlaneseq
    %v1104 = vshrl.u32 %v1103, 7
    %v1105 = vsub.s32 4, %v1104
    %v1106 = vrot.slane %v37, %v1105
    %v1107 = vlaneseq
    %v1108 = vshrl.u32 %v1107, 7
    %v1109 = vsub.s32 4, %v1108
    %v1110 = vrot.slane %v38, %v1109
    %v1111 = vmul.f32 %v551, %v1106
    %v1112 = vmul.f32 %v551, %v1110
    %v1113 = vmul.f32 %v555, %v1106
    %v1114 = vmul.f32 %v555, %v1110
    %v1115 = vmul.f32 %v559, %v1106
    %v1116 = vmul.f32 %v559, %v1110
    %v1117 = vmul.f32 %v563, %v1106
    %v1118 = vmul.f32 %v563, %v1110
    %v1119 = vadd.f32 %v1095, %v1111
    %v1120 = vadd.f32 %v1096, %v1112
    %v1121 = vadd.f32 %v1097, %v1113
    %v1122 = vadd.f32 %v1098, %v1114
    %v1123 = vadd.f32 %v1099, %v1115
    %v1124 = vadd.f32 %v1100, %v1116
    %v1125 = vadd.f32 %v1101, %v1117
    %v1126 = vadd.f32 %v1102, %v1118
    %v1127 = vlaneseq
    %v1128 = vshrl.u32 %v1127, 7
    %v1129 = vsub.s32 5, %v1128
    %v1130 = vrot.slane %v37, %v1129
    %v1131 = vlaneseq
    %v1132 = vshrl.u32 %v1131, 7
    %v1133 = vsub.s32 5, %v1132
    %v1134 = vrot.slane %v38, %v1133
    %v1135 = vmul.f32 %v591, %v1130
    %v1136 = vmul.f32 %v591, %v1134
    %v1137 = vmul.f32 %v595, %v1130
    %v1138 = vmul.f32 %v595, %v1134
    %v1139 = vmul.f32 %v599, %v1130
    %v1140 = vmul.f32 %v599, %v1134
    %v1141 = vmul.f32 %v603, %v1130
    %v1142 = vmul.f32 %v603, %v1134
    %v1143 = vadd.f32 %v1119, %v1135
    %v1144 = vadd.f32 %v1120, %v1136
    %v1145 = vadd.f32 %v1121, %v1137
    %v1146 = vadd.f32 %v1122, %v1138
    %v1147 = vadd.f32 %v1123, %v1139
    %v1148 = vadd.f32 %v1124, %v1140
    %v1149 = vadd.f32 %v1125, %v1141
    %v1150 = vadd.f32 %v1126, %v1142
    %v1151 = vmax.f32 %v1143, 0.0
    %v1152 = vmax.f32 %v1144, 0.0
    %v1153 = vmax.f32 %v1145, 0.0
    %v1154 = vmax.f32 %v1146, 0.0
    %v1155 = vmax.f32 %v1147, 0.0
    %v1156 = vmax.f32 %v1148, 0.0
    %v1157 = vmax.f32 %v1149, 0.0
    %v1158 = vmax.f32 %v1150, 0.0
    %v1159 = vadd.f32 %v1151, %v1152
    %1160 = vadd.xlane.f32.xlu0 %v1159
    %v1161 = vpop.xlane.xlu0 %1160
    %v1162 = vadd.f32 %v1153, %v1154
    %1163 = vadd.xlane.f32.xlu0 %v1162
    %v1164 = vpop.xlane.xlu0 %1163
    %v1165 = vadd.f32 %v1155, %v1156
    %1166 = vadd.xlane.f32.xlu0 %v1165
    %v1167 = vpop.xlane.xlu0 %1166
    %v1168 = vadd.f32 %v1157, %v1158
    %1169 = vadd.xlane.f32.xlu0 %v1168
    %v1170 = vpop.xlane.xlu0 %1169
    %v1171 = vmul.f32 %v1161, %v649
    %v1172 = vmul.f32 %v1164, %v649
    %v1173 = vmul.f32 %v1167, %v649
    %v1174 = vmul.f32 %v1170, %v649
    %1175 = vxpose.xlu0.b32.start [1/16] %v1171, 128
    %1176 = vxpose.xlu0.b32.cont [2/16] %v1172, 128
    %1177 = vxpose.xlu0.b32.cont [3/16] %v1173, 128
    %1178 = vxpose.xlu0.b32.cont [4/16] %v1174, 128
    %1179 = vxpose.xlu0.b32.cont [5/16] 0.0, 128
    %1180 = vxpose.xlu0.b32.cont [6/16] 0.0, 128
    %1181 = vxpose.xlu0.b32.cont [7/16] 0.0, 128
    %1182 = vxpose.xlu0.b32.cont [8/16] 0.0, 128
    %1183 = vxpose.xlu0.b32.cont [9/16] 0.0, 128
    %1184 = vxpose.xlu0.b32.cont [10/16] 0.0, 128
    %1185 = vxpose.xlu0.b32.cont [11/16] 0.0, 128
    %1186 = vxpose.xlu0.b32.cont [12/16] 0.0, 128
    %1187 = vxpose.xlu0.b32.cont [13/16] 0.0, 128
    %1188 = vxpose.xlu0.b32.cont [14/16] 0.0, 128
    %1189 = vxpose.xlu0.b32.cont [15/16] 0.0, 128
    %1190 = vxpose.xlu0.b32.end [16/16] 0.0, 128
    %v1191 = vpop.trf.xlu0
    %v1192 = vpop.trf.xlu0
    %v1193 = vpop.trf.xlu0
    %v1194 = vpop.trf.xlu0
    %v1195 = vpop.trf.xlu0
    %v1196 = vpop.trf.xlu0
    %v1197 = vpop.trf.xlu0
    %v1198 = vpop.trf.xlu0
    %v1199 = vpop.trf.xlu0
    %v1200 = vpop.trf.xlu0
    %v1201 = vpop.trf.xlu0
    %v1202 = vpop.trf.xlu0
    %v1203 = vpop.trf.xlu0
    %v1204 = vpop.trf.xlu0
    %v1205 = vpop.trf.xlu0
    %v1206 = vpop.trf.xlu0
    %v1208 = vsel %vm686, %v1191, 0
    %1210 = vmatprep.subr.mxu0 0.0
    %1211 = vmatpush1.msra.mxu0 %v62
    %1212 = vmatprep.subr.mxu0 0.0
    %1213 = vmatpush1.msra.mxu0 %v63
    %1214 = vmatprep.subr.mxu0 0.0
    %1215 = vmatpush1.msra.mxu0 %v64
    %1216 = vmatprep.subr.mxu0 0.0
    %1217 = vmatpush1.msra.mxu0 %v65
    %1218 = vmatprep.subr.mxu0 0.0
    %1219 = vmatpush1.msra.mxu0 0.0
    %1220 = vmatprep.subr.mxu0 0.0
    %1221 = vmatpush1.msra.mxu0 0.0
    %1222 = vmatprep.subr.mxu0 0.0
    %1223 = vmatpush1.msra.mxu0 0.0
    %1224 = vmatprep.subr.mxu0 0.0
    %1225 = vmatpush1.msra.mxu0 0.0
    %1226 = vmatprep.subr.mxu0 0.0
    %1227 = vmatpush1.msra.mxu0 0.0
    %1228 = vmatprep.subr.mxu0 0.0
    %1229 = vmatpush1.msra.mxu0 0.0
    %1230 = vmatprep.subr.mxu0 0.0
    %1231 = vmatpush1.msra.mxu0 0.0
    %1232 = vmatprep.subr.mxu0 0.0
    %1233 = vmatpush1.msra.mxu0 0.0
    %1234 = vmatprep.subr.mxu0 0.0
    %1235 = vmatpush1.msra.mxu0 0.0
    %1236 = vmatprep.subr.mxu0 0.0
    %1237 = vmatpush1.msra.mxu0 0.0
    %1238 = vmatprep.subr.mxu0 0.0
    %1239 = vmatpush1.msra.mxu0 0.0
    %1240 = vmatprep.subr.mxu0 0.0
    %1241 = vmatpush1.msra.mxu0 0.0
    %1242 = vmatprep.subr.mxu0 0.0
    %1243 = vmatpush1.msra.mxu0 0.0
    %1244 = vmatprep.subr.mxu0 0.0
    %1245 = vmatpush1.msra.mxu0 0.0
    %1246 = vmatprep.subr.mxu0 0.0
    %1247 = vmatpush1.msra.mxu0 0.0
    %1248 = vmatprep.subr.mxu0 0.0
    %1249 = vmatpush1.msra.mxu0 0.0
    %1250 = vmatprep.subr.mxu0 0.0
    %1251 = vmatpush1.msra.mxu0 0.0
    %1252 = vmatprep.subr.mxu0 0.0
    %1253 = vmatpush1.msra.mxu0 0.0
    %1254 = vmatprep.subr.mxu0 0.0
    %1255 = vmatpush1.msra.mxu0 0.0
    %1256 = vmatprep.subr.mxu0 0.0
    %1257 = vmatpush1.msra.mxu0 0.0
    %1258 = vmatprep.subr.mxu0 0.0
    %1259 = vmatpush1.msra.mxu0 0.0
    %1260 = vmatprep.subr.mxu0 0.0
    %1261 = vmatpush1.msra.mxu0 0.0
    %1262 = vmatprep.subr.mxu0 0.0
    %1263 = vmatpush1.msra.mxu0 0.0
    %1264 = vmatprep.subr.mxu0 0.0
    %1265 = vmatpush1.msra.mxu0 0.0
    %1266 = vmatprep.subr.mxu0 0.0
    %1267 = vmatpush1.msra.mxu0 0.0
    %1268 = vmatprep.subr.mxu0 0.0
    %1269 = vmatpush1.msra.mxu0 0.0
    %1270 = vmatprep.subr.mxu0 0.0
    %1271 = vmatpush1.msra.mxu0 0.0
    %1272 = vmatprep.subr.mxu0 0.0
    %1273 = vmatpush1.msra.mxu0 0.0
    %1274 = vmatprep.mubr.f32.mxu0 0.0
    %1275 = vmatmul.mubr.f32.gmra.mrb[0].mxu0 %v1208
    %v1276 = vpop.f32.mrb[0].mxu0
    %v1277 = vadd.f32 %v66, %v1276
    %v1278 = vpop.f32.mrb[0].mxu0
    %1279 = vdwg.mxu0
    %v1282 = vrot.slane %v1085, 7
    %v1283 = vrot.slane %v1086, 7
    %vm1286 = vcmask 1040384
    %v1287 = vsel %vm1286, %v511, %v1282
    %v1288 = vsel %vm1286, %v512, %v1283
    %v1291 = vcombine.low %v1287, %v1288
    %v1293 = vunpack.c.l.s4 1983009808
    %v1294 = vunpack.c.0.s8 %v1293
    %v1295 = vlaneseq
    %v1296 = vshrl.u32 %v1295, 7
    %v1297 = vsub.s32 %v1294, %v1296
    %v1298 = vrot.slane %v1291, %v1297
    %1300 = vst [vmem:[%s9] sm:$0xf] %v1298
    %v1302 = vlaneseq
    %v1303 = vshrl.u32 %v1302, 7
    %v1304 = vsub.s32 0, %v1303
    %v1305 = vrot.slane %v814, %v1304
    %v1307 = vsel %vm1286, %v238, %v1305
    %1308 = vst [vmem:[#allocation2] sm:$0x3] %v1307
    %v1310 = vrot.slane %v1277, 7
    %v1312 = vsel %vm1286, %v757, %v1310
    %1313 = vst [vmem:[#allocation4] sm:$0x3] %v1312
    // Predicated region
    $region38: #{as_resnet_forward.1} parent=1 // pred_check
      _
    $region39: #{as_resnet_forward.1} parent=1 // pred_check_branch
      %1315 = sbr.rel (0) target = $region41
    $region40: #{as_resnet_forward.1} parent=1 // pred_region
      _
    $region41: #{as_resnet_forward.1} parent=1 // pred_fallthru
      _
    // Predicated region
    $region42: #{as_resnet_forward.1} parent=1 // pred_check
      _
    $region43: #{as_resnet_forward.1} parent=1 // pred_check_branch
      %1317 = sbr.rel (0) target = $region45
    $region44: #{as_resnet_forward.1} parent=1 // pred_region
      %s1319 = ssub.s32 32, 32
      %1320 = vsyncadd [#allocation3], %s1319
      %s1322 = sshll.u32 [#allocation2], 4
      %s1323 = int_to_ptr.vmem [resolvable:$true] %s1322
      %1325 = dma.vmem_to_hbm [thread:$0]  %s1323, 32, %s10, [#allocation3]
    $region45: #{as_resnet_forward.1} parent=1 // pred_fallthru
      _
    // Predicated region
    $region46: #{as_resnet_forward.1} parent=1 // pred_check
      _
    $region47: #{as_resnet_forward.1} parent=1 // pred_check_branch
      %1327 = sbr.rel (0) target = $region49
    $region48: #{as_resnet_forward.1} parent=1 // pred_region
      %s1329 = ssub.s32 32, 32
      %1330 = vsyncadd [#allocation5], %s1329
      %s1332 = sshll.u32 [#allocation4], 4
      %s1333 = int_to_ptr.vmem [resolvable:$true] %s1332
      %1335 = dma.vmem_to_hbm [thread:$0]  %s1333, 32, %s11, [#allocation5]
    $region49: #{as_resnet_forward.1} parent=1 // pred_fallthru
      _
    // Predicated region
    $region50: #{as_resnet_forward.1} parent=1 // pred_check
      _
    $region51: #{as_resnet_forward.1} parent=1 // pred_check_branch
      %1337 = sbr.rel (0) target = $region53
    $region52: #{as_resnet_forward.1} parent=1 // pred_region
      _
    $region53: #{as_resnet_forward.1} parent=1 // pred_fallthru
      _
    // Predicated region
    $region54: #{as_resnet_forward.1} parent=1 // pred_check
      _
    $region55: #{as_resnet_forward.1} parent=1 // pred_check_branch
      %1339 = sbr.rel (0) target = $region57
    $region56: #{as_resnet_forward.1} parent=1 // pred_region
      %1340 = dma.done [#allocation3], 32
    $region57: #{as_resnet_forward.1} parent=1 // pred_fallthru
      _
    // Predicated region
    $region58: #{as_resnet_forward.1} parent=1 // pred_check
      _
    $region59: #{as_resnet_forward.1} parent=1 // pred_check_branch
      %1342 = sbr.rel (0) target = $region61
    $region60: #{as_resnet_forward.1} parent=1 // pred_region
      %1343 = dma.done [#allocation5], 32
    $region61: #{as_resnet_forward.1} parent=1 // pred_fallthru
      _
    %1344 = vsyncpa [#allocation3], 1
    %1345 = vsyncpa [#allocation5], 1

</llo_original>
